<compile_context>
chip_gen: v7x
topology: tpu7x:2x2x1
jax: 0.10.0
libtpu: 0.0.40
codegen_flags: <defaults>
</compile_context>

<pallas_src>
import jax
import jax.numpy as jnp
from jax.experimental import pallas as pl
from jax.experimental.pallas import tpu as pltpu

LANE = 128


def _round_up(x, m):
    return ((x + m - 1) // m) * m


def _sigmoid(x):
    # sigmoid(x) == 0.5*tanh(0.5*x) + 0.5 : a single EUP push per gate instead
    # of exp + reciprocal.
    return 0.5 * jnp.tanh(0.5 * x) + 0.5


def _vmem_limit_bytes():
    """Scoped-VMEM limit request, derived from the chip when queryable."""
    try:
        cap = int(pltpu.get_tpu_info().vmem_capacity_bytes)
    except Exception:
        cap = 64 << 20            # conservative fallback (v7x per-core physical)
    return int(min(cap * 3 // 4, 96 << 20))


def _layer_vmem_bytes(tc, B, Din, Hp):
    """Rough per-layer working-set estimate used to size the time block."""
    xb = 2 * (tc * B * Din) * 2            # bf16 x block, double-buffered
    yb = 2 * (tc * B * Hp) * 2             # bf16 y block, double-buffered
    gi = tc * B * 3 * Hp * 2               # bf16 hoisted input projection
    w = 2 * ((Din + Hp) * 3 * Hp) * 2      # bf16 Wi + Wh, double-buffered
    b = 2 * (3 * Hp + Hp) * 4 * 2          # f32 biases, double-buffered
    h = B * Hp * 4                         # f32 hidden carry
    hf = 2 * (B * Hp) * 4                  # f32 final-hidden output block
    return xb + yb + gi + w + b + h + hf


def _choose_tc(T, B, Din, Hp, budget_bytes):
    """Largest time block that divides T, keeps the x block sublane-aligned,
    and whose estimated VMEM working set fits the scoped budget."""
    cands = [tc for tc in range(T, 0, -1)
             if T % tc == 0 and ((tc * B) % 8 == 0 or tc == T)]
    for tc in cands:
        if tc <= 128 and _layer_vmem_bytes(tc, B, Din, Hp) <= budget_bytes:
            return tc
    return cands[-1] if cands else T       # smallest aligned block as fallback


# ----------------------------------------------------------------------------
# Pallas kernel: one full bidirectional GRU layer.
# ----------------------------------------------------------------------------
def gru_bidir_kernel(x_ref, wi_ref, wh_ref, bgi_ref, bhn_ref,
                     y_ref, hfin_ref, h_sc, gi_sc):
    d = pl.program_id(0)                  # direction: 0 = fwd, 1 = bwd
    i = pl.program_id(1)                  # time block
    nblk = pl.num_programs(1)
    Tc, B, Hp = y_ref.shape               # B here is the 8-padded batch

    @pl.when(i == 0)
    def _init():
        h_sc[...] = jnp.zeros_like(h_sc)

    # Hoisted, time-parallel input projection: one big MXU call per block.
    # (b_ir+b_hr, b_iz+b_hz, b_in) are folded into bgi; only b_hn stays apart.
    gi = jnp.dot(x_ref[...], wi_ref[0], preferred_element_type=jnp.float32)
    # B is a multiple of 8 -> this leading-axis split is tile-aligned (free).
    gi_sc[...] = (gi + bgi_ref[0]).reshape(Tc, B, 3 * Hp).astype(gi_sc.dtype)

    wh = wh_ref[0]                        # (Hp, 3Hp) bf16, resident in VMEM
    bhn = bhn_ref[0]                      # (1, Hp)  f32

    def step(j, h):
        # local time inside the block; reversed for the backward direction
        lt = j + d * (Tc - 1 - 2 * j)
        gh = jnp.dot(h.astype(jnp.bfloat16), wh,
                     preferred_element_type=jnp.float32)         # (B, 3Hp)
        g = gi_sc[lt].astype(jnp.float32)                        # (B, 3Hp), aligned
        r = _sigmoid(g[:, 0:Hp] + gh[:, 0:Hp])
        z = _sigmoid(g[:, Hp:2 * Hp] + gh[:, Hp:2 * Hp])
        n = jnp.tanh(g[:, 2 * Hp:3 * Hp] + r * (gh[:, 2 * Hp:3 * Hp] + bhn))
        h_new = (1.0 - z) * n + z * h
        y_ref[lt] = h_new.astype(y_ref.dtype)
        return h_new

    # Partial unroll: keeps the MXU/EUP slots fed without blowing up code size
    # (full unroll of Tc=64+ bodies risks vreg spills / long compiles).
    h_last = jax.lax.fori_loop(0, Tc, step, h_sc[...], unroll=min(Tc, 8))
    h_sc[...] = h_last

    @pl.when(i == nblk - 1)
    def _finalize():
        hfin_ref[0] = h_last


def gru_bidir_layer(x_tbd, wi, wh, bgi, bhn):
    """x_tbd: (T, Bp, Din) bf16 with Bp % 8 == 0.
    Returns y (T, Bp, 2*Hp) bf16 and hfin (2, Bp, Hp) f32."""
    T, B, Din = x_tbd.shape
    Hp = wh.shape[1]
    vmem_limit = _vmem_limit_bytes()
    Tc = _choose_tc(T, B, Din, Hp, int(vmem_limit * 0.8))
    nblk = T // Tc
    x2 = x_tbd.reshape(T * B, Din)        # contiguous -> free reshape in HBM

    def tblk(d, i):                       # fwd reads block i, bwd reads nblk-1-i
        return i + d * (nblk - 1 - 2 * i)

    # NOTE: the weight/bias blocks depend only on d; single-buffering them
    # (pipeline_mode=pl.Buffered(1)) would save a little more VMEM — left out
    # here pending per-version validation of buffer_count=1.
    return pl.pallas_call(
        gru_bidir_kernel,
        out_shape=(jax.ShapeDtypeStruct((T, B, 2 * Hp), jnp.bfloat16),
                   jax.ShapeDtypeStruct((2, B, Hp), jnp.float32)),
        grid_spec=pltpu.PrefetchScalarGridSpec(
            num_scalar_prefetch=0,
            grid=(2, nblk),
            in_specs=[
                pl.BlockSpec((Tc * B, Din), lambda d, i: (tblk(d, i), 0)),
                pl.BlockSpec((1, Din, 3 * Hp), lambda d, i: (d, 0, 0)),
                pl.BlockSpec((1, Hp, 3 * Hp), lambda d, i: (d, 0, 0)),
                pl.BlockSpec((1, 1, 3 * Hp), lambda d, i: (d, 0, 0)),
                pl.BlockSpec((1, 1, Hp), lambda d, i: (d, 0, 0)),
            ],
            out_specs=[
                # fwd hidden -> cols [0:Hp], bwd hidden -> cols [Hp:2Hp]
                pl.BlockSpec((Tc, B, Hp), lambda d, i: (tblk(d, i), 0, d)),
                pl.BlockSpec((1, B, Hp), lambda d, i: (d, 0, 0)),
            ],
            scratch_shapes=[
                pltpu.VMEM((B, Hp), jnp.float32),            # hidden-state carry
                pltpu.VMEM((Tc, B, 3 * Hp), jnp.bfloat16),   # hoisted input proj
            ],
        ),
        compiler_params=pltpu.CompilerParams(
            # the two directions are independent -> run on both TCs on v7x
            dimension_semantics=("parallel", "arbitrary"),
            vmem_limit_bytes=vmem_limit),
    )(x2, wi, wh, bgi, bhn)


# ----------------------------------------------------------------------------
# Model wrapper (glue in plain JAX)
# ----------------------------------------------------------------------------
def bert_gru_sentiment_forward(text, kparams):
    # TODO(synk): pretrained BERT encoder not implemented; replaced with a
    # deterministic embedding-table lookup stand-in (attention_mask unused).
    attention_mask = (text != 0).astype(jnp.int32)
    del attention_mask
    B = text.shape[0]
    Bp = _round_up(B, 8)                  # sublane-align the batch

    # Gather with transposed indices lands activations directly in (T, B, E)
    # layout — no HBM-materializing transpose of the activation tensor.
    x = kparams["embedding"][text.T].astype(jnp.bfloat16)       # (T, B, E)
    if Bp != B:
        x = jnp.pad(x, ((0, 0), (0, Bp - B), (0, 0)))           # (T, Bp, E)

    hfin = None
    for layer in kparams["gru_layers"]:
        x, hfin = gru_bidir_layer(x, layer["wi"], layer["wh"],
                                  layer["bgi"], layer["bhn"])
        # x is now (T, Bp, 2*Hp) bf16 = next layer input; no wrapper concat.

    hfin = hfin[:, :B]                    # drop batch padding
    # hidden[-2] / hidden[-1] of the PyTorch GRU == hfin[0] / hfin[1].
    # Dropout is identity at inference.  The (B, 2H) x (2H, O=2) output Linear
    # is left to XLA: O << 128 lanes means masked stores / negligible compute,
    # so a dedicated pallas_call would cost more than it saves.
    return (jnp.dot(hfin[0], kparams["out_w"][0]) +
            jnp.dot(hfin[1], kparams["out_w"][1]) + kparams["out_b"])


# ----------------------------------------------------------------------------
# Pure-JAX reference (f32, unpadded) for correctness checking.
# ----------------------------------------------------------------------------
def gru_layer_ref(x_tbe, wi, wh, bi, bh):
    H = wh.shape[0]
    B = x_tbe.shape[1]

    def step(h, x_t):
        gi = x_t @ wi + bi
        gh = h @ wh + bh
        r = jax.nn.sigmoid(gi[:, :H] + gh[:, :H])
        z = jax.nn.sigmoid(gi[:, H:2 * H] + gh[:, H:2 * H])
        n = jnp.tanh(gi[:, 2 * H:] + r * gh[:, 2 * H:])
        h_new = (1.0 - z) * n + z * h
        return h_new, h_new

    h0 = jnp.zeros((B, H), jnp.float32)
    hT, ys = jax.lax.scan(step, h0, x_tbe)
    return ys, hT


def forward_ref(text, params):
    embedded = params["embedding"][text]
    x = jnp.transpose(embedded, (1, 0, 2)).astype(jnp.float32)
    hf = hb = None
    inp = x
    for layer in params["gru_layers"]:
        yf, hf = gru_layer_ref(inp, *layer["fwd"])
        yb_rev, hb = gru_layer_ref(inp[::-1], *layer["bwd"])
        yb = yb_rev[::-1]
        inp = jnp.concatenate([yf, yb], axis=-1)
    h = jnp.concatenate([hf, hb], axis=1)
    return h @ params["out_w_t"] + params["out_b"]


# ----------------------------------------------------------------------------
# Deterministic parameters + packing into the kernel layout.
# ----------------------------------------------------------------------------
def init_params(key, vocab, E, H, O, n_layers):
    ks = iter(jax.random.split(key, 64))
    k = 1.0 / jnp.sqrt(H)

    def unif(rng, shape, scale):
        return jax.random.uniform(rng, shape, jnp.float32, -scale, scale)

    params = {"embedding": unif(next(ks), (vocab, E), 0.1)}
    layers = []
    for l in range(n_layers):
        in_dim = E if l == 0 else 2 * H
        layer = {}
        for d in ("fwd", "bwd"):
            wi = unif(next(ks), (in_dim, 3 * H), k)   # transposed weight_ih
            wh = unif(next(ks), (H, 3 * H), k)        # transposed weight_hh
            bi = unif(next(ks), (1, 3 * H), k)
            bh = unif(next(ks), (1, 3 * H), k)
            layer[d] = (wi, wh, bi, bh)
        layers.append(layer)
    params["gru_layers"] = layers
    params["out_w_t"] = unif(next(ks), (2 * H, O), 1.0 / jnp.sqrt(2 * H))
    params["out_b"] = unif(next(ks), (1, O), 1.0 / jnp.sqrt(2 * H))
    return params


def _pad_gate_cols(w, H, Hp):
    """(..., 3H) -> (..., 3Hp): zero-pad each gate block (r|z|n) to Hp lanes."""
    pads = [(0, 0)] * (w.ndim - 1) + [(0, Hp - H)]
    return jnp.concatenate(
        [jnp.pad(w[..., g * H:(g + 1) * H], pads) for g in range(3)], axis=-1)


def pack_params(params):
    """Pad / stack / cast the logical parameters into the kernel layout."""
    H = params["gru_layers"][0]["fwd"][1].shape[0]
    Hp = _round_up(H, LANE)
    out = {"embedding": params["embedding"]}

    layers = []
    for li, layer in enumerate(params["gru_layers"]):
        wis, whs, bgis, bhns = [], [], [], []
        for d in ("fwd", "bwd"):
            wi, wh, bi, bh = layer[d]
            if li > 0:
                # previous layer's output is [fwd Hp | bwd Hp]: pad each half
                # of the 2H input rows to Hp so rows line up with padded feats.
                wi = jnp.concatenate(
                    [jnp.pad(wi[:H], ((0, Hp - H), (0, 0))),
                     jnp.pad(wi[H:], ((0, Hp - H), (0, 0)))], axis=0)
            wh = jnp.pad(wh, ((0, Hp - H), (0, 0)))
            # fold b_hr, b_hz into the hoisted input-projection bias
            bgi = jnp.concatenate(
                [bi[:, 0:H] + bh[:, 0:H],
                 bi[:, H:2 * H] + bh[:, H:2 * H],
                 bi[:, 2 * H:3 * H]], axis=1)
            bhn = bh[:, 2 * H:3 * H]
            wis.append(_pad_gate_cols(wi, H, Hp).astype(jnp.bfloat16))
            whs.append(_pad_gate_cols(wh, H, Hp).astype(jnp.bfloat16))
            bgis.append(_pad_gate_cols(bgi, H, Hp))
            bhns.append(jnp.pad(bhn, ((0, 0), (0, Hp - H))))
        layers.append({"wi": jnp.stack(wis), "wh": jnp.stack(whs),
                       "bgi": jnp.stack(bgis), "bhn": jnp.stack(bhns)})
    out["gru_layers"] = layers

    w = params["out_w_t"]                                         # (2H, O)
    out["out_w"] = jnp.stack([jnp.pad(w[:H], ((0, Hp - H), (0, 0))),
                              jnp.pad(w[H:], ((0, Hp - H), (0, 0)))])  # (2,Hp,O)
    out["out_b"] = params["out_b"]
    return out


if __name__ == "__main__":
    B, T = 2, 8          # batch, sequence length
    VOCAB = 100
    E = 32               # bert hidden_size (embedding_dim)
    H = 16               # GRU hidden_dim
    O = 2                # output_dim
    N_LAYERS = 2         # bidirectional, 2 layers

    key = jax.random.PRNGKey(0)
    k_text, k_params = jax.random.split(key)
    text = jax.random.randint(k_text, (B, T), 0, VOCAB, dtype=jnp.int32)
    params = init_params(k_params, VOCAB, E, H, O, N_LAYERS)
    kparams = pack_params(params)

    out = jax.block_until_ready(bert_gru_sentiment_forward(text, kparams))
    ref = jax.block_until_ready(forward_ref(text, params))

    assert out.shape == (B, O), out.shape
    # bf16 matmul operands + bf16 storage of the hoisted pre-activations, with
    # f32 accumulation and f32 gate math -> slightly looser tolerance.
    assert jnp.allclose(out, ref, atol=3e-2, rtol=3e-2), (out, ref)
    print("KERNEL_OK")
</pallas_src>

<mosaic_0001>
module attributes {stable_mosaic.version = 11 : i64} {
  func.func @gru_bidir_kernel(%arg0: i32, %arg1: i32, %arg2: memref<64x32xbf16, #tpu.memory_space<vmem>>, %arg3: memref<1x32x384xbf16, #tpu.memory_space<vmem>>, %arg4: memref<1x128x384xbf16, #tpu.memory_space<vmem>>, %arg5: memref<1x1x384xf32, #tpu.memory_space<vmem>>, %arg6: memref<1x1x128xf32, #tpu.memory_space<vmem>>, %arg7: memref<8x8x128xbf16, #tpu.memory_space<vmem>>, %arg8: memref<1x8x128xf32, #tpu.memory_space<vmem>>, %arg9: memref<8x128xf32, #tpu.memory_space<vmem>>, %arg10: memref<8x8x384xbf16, #tpu.memory_space<vmem>>) attributes {dimension_semantics = [#tpu.dimension_semantics<parallel>, #tpu.dimension_semantics<arbitrary>], iteration_bounds = array<i64: 2, 1>, scalar_prefetch = 0 : i64, scratch_operands = 2 : i64, tpu.core_type = #tpu.core_type<tc>, window_params = [{transform_indices = @transform_0, window_bounds = array<i64: 64, 32>}, {transform_indices = @transform_1, window_bounds = array<i64: 1, 32, 384>}, {transform_indices = @transform_2, window_bounds = array<i64: 1, 128, 384>}, {transform_indices = @transform_3, window_bounds = array<i64: 1, 1, 384>}, {transform_indices = @transform_4, window_bounds = array<i64: 1, 1, 128>}, {transform_indices = @transform_5, window_bounds = array<i64: 8, 8, 128>}, {transform_indices = @transform_6, window_bounds = array<i64: 1, 8, 128>}]} {
    %c0_i32 = arith.constant 0 : i32
    %0 = arith.cmpi eq, %arg1, %c0_i32 : i32
    %1 = arith.extui %0 : i1 to i32
    %c0_i32_0 = arith.constant 0 : i32
    %2 = arith.cmpi ne, %1, %c0_i32_0 : i32
    scf.if %2 {
      %cst_136 = arith.constant 0.000000e+00 : f32
      %399 = vector.broadcast %cst_136 : f32 to vector<8x128xf32>
      %c0_137 = arith.constant 0 : index
      %c0_138 = arith.constant 0 : index
      %400 = vector.load %arg9[%c0_137, %c0_138] : memref<8x128xf32, #tpu.memory_space<vmem>>, vector<8x128xf32>
      tpu.vector_store %arg9[%c0_137, %c0_138], %399 {strides = array<i32>} : memref<8x128xf32, #tpu.memory_space<vmem>>, vector<8x128xf32>,
    } else {
    }
    %c0 = arith.constant 0 : index
    %c0_1 = arith.constant 0 : index
    %3 = vector.load %arg2[%c0, %c0_1] : memref<64x32xbf16, #tpu.memory_space<vmem>>, vector<64x32xbf16>
    %c0_2 = arith.constant 0 : index
    %c0_3 = arith.constant 0 : index
    %c0_4 = arith.constant 0 : index
    %4 = vector.load %arg3[%c0_2, %c0_3, %c0_4] : memref<1x32x384xbf16, #tpu.memory_space<vmem>>, vector<1x32x384xbf16>
    %5 = vector.shape_cast %4 : vector<1x32x384xbf16> to vector<32x384xbf16>
    %cst = arith.constant dense<0.000000e+00> : vector<64x384xf32>
    %6 = tpu.matmul %3, %5, %cst {dimension_numbers = #tpu.dot_dimension_numbers<[1], [0], [0], [1], [0, 0, 1, 1], [], []>} : vector<64x32xbf16>, vector<32x384xbf16>, vector<64x384xf32> -> vector<64x384xf32>
    %c0_5 = arith.constant 0 : index
    %c0_6 = arith.constant 0 : index
    %c0_7 = arith.constant 0 : index
    %7 = vector.load %arg5[%c0_5, %c0_6, %c0_7] : memref<1x1x384xf32, #tpu.memory_space<vmem>>, vector<1x1x384xf32>
    %8 = vector.shape_cast %7 : vector<1x1x384xf32> to vector<1x384xf32>
    %9 = vector.broadcast %8 : vector<1x384xf32> to vector<64x384xf32>
    %10 = arith.addf %6, %9 : vector<64x384xf32>
    %11 = vector.shape_cast %10 : vector<64x384xf32> to vector<8x8x384xf32>
    %12 = arith.truncf %11 : vector<8x8x384xf32> to vector<8x8x384xbf16>
    %c0_8 = arith.constant 0 : index
    %c0_9 = arith.constant 0 : index
    %c0_10 = arith.constant 0 : index
    %13 = vector.load %arg10[%c0_8, %c0_9, %c0_10] : memref<8x8x384xbf16, #tpu.memory_space<vmem>>, vector<8x8x384xbf16>
    tpu.vector_store %arg10[%c0_8, %c0_9, %c0_10], %12 {strides = array<i32>} : memref<8x8x384xbf16, #tpu.memory_space<vmem>>, vector<8x8x384xbf16>,
    %c0_11 = arith.constant 0 : index
    %c0_12 = arith.constant 0 : index
    %c0_13 = arith.constant 0 : index
    %14 = vector.load %arg4[%c0_11, %c0_12, %c0_13] : memref<1x128x384xbf16, #tpu.memory_space<vmem>>, vector<1x128x384xbf16>
    %15 = vector.shape_cast %14 : vector<1x128x384xbf16> to vector<128x384xbf16>
    %c0_14 = arith.constant 0 : index
    %c0_15 = arith.constant 0 : index
    %c0_16 = arith.constant 0 : index
    %16 = vector.load %arg6[%c0_14, %c0_15, %c0_16] : memref<1x1x128xf32, #tpu.memory_space<vmem>>, vector<1x1x128xf32>
    %17 = vector.shape_cast %16 : vector<1x1x128xf32> to vector<1x128xf32>
    %c0_17 = arith.constant 0 : index
    %c0_18 = arith.constant 0 : index
    %18 = vector.load %arg9[%c0_17, %c0_18] : memref<8x128xf32, #tpu.memory_space<vmem>>, vector<8x128xf32>
    %c0_i32_19 = arith.constant 0 : i32
    %c2_i32 = arith.constant 2 : i32
    %19 = arith.muli %c2_i32, %c0_i32_19 : i32
    %c7_i32 = arith.constant 7 : i32
    %20 = arith.subi %c7_i32, %19 : i32
    %21 = arith.muli %arg0, %20 : i32
    %22 = arith.addi %c0_i32_19, %21 : i32
    %23 = arith.truncf %18 : vector<8x128xf32> to vector<8x128xbf16>
    %cst_20 = arith.constant dense<0.000000e+00> : vector<8x384xf32>
    %24 = tpu.matmul %23, %15, %cst_20 {dimension_numbers = #tpu.dot_dimension_numbers<[1], [0], [0], [1], [0, 0, 1, 1], [], []>} : vector<8x128xbf16>, vector<128x384xbf16>, vector<8x384xf32> -> vector<8x384xf32>
    %25 = arith.index_cast %22 : i32 to index
    %c0_21 = arith.constant 0 : index
    %c0_22 = arith.constant 0 : index
    %26 = vector.load %arg10[%25, %c0_21, %c0_22] : memref<8x8x384xbf16, #tpu.memory_space<vmem>>, vector<1x8x384xbf16>
    %27 = vector.shape_cast %26 : vector<1x8x384xbf16> to vector<8x384xbf16>
    %28 = arith.extf %27 : vector<8x384xbf16> to vector<8x384xf32>
    %29 = vector.extract_strided_slice %28 {offsets = [0, 0], sizes = [8, 128], strides = [1, 1]} : vector<8x384xf32> to vector<8x128xf32>
    %30 = vector.extract_strided_slice %24 {offsets = [0, 0], sizes = [8, 128], strides = [1, 1]} : vector<8x384xf32> to vector<8x128xf32>
    %31 = arith.addf %29, %30 : vector<8x128xf32>
    %cst_23 = arith.constant 5.000000e-01 : f32
    %32 = vector.broadcast %cst_23 : f32 to vector<8x128xf32>
    %33 = arith.mulf %32, %31 : vector<8x128xf32>
    %34 = math.tanh %33 : vector<8x128xf32>
    %cst_24 = arith.constant 5.000000e-01 : f32
    %35 = vector.broadcast %cst_24 : f32 to vector<8x128xf32>
    %36 = arith.mulf %35, %34 : vector<8x128xf32>
    %cst_25 = arith.constant 5.000000e-01 : f32
    %37 = vector.broadcast %cst_25 : f32 to vector<8x128xf32>
    %38 = arith.addf %36, %37 : vector<8x128xf32>
    %39 = vector.extract_strided_slice %28 {offsets = [0, 128], sizes = [8, 128], strides = [1, 1]} : vector<8x384xf32> to vector<8x128xf32>
    %40 = vector.extract_strided_slice %24 {offsets = [0, 128], sizes = [8, 128], strides = [1, 1]} : vector<8x384xf32> to vector<8x128xf32>
    %41 = arith.addf %39, %40 : vector<8x128xf32>
    %cst_26 = arith.constant 5.000000e-01 : f32
    %42 = vector.broadcast %cst_26 : f32 to vector<8x128xf32>
    %43 = arith.mulf %42, %41 : vector<8x128xf32>
    %44 = math.tanh %43 : vector<8x128xf32>
    %cst_27 = arith.constant 5.000000e-01 : f32
    %45 = vector.broadcast %cst_27 : f32 to vector<8x128xf32>
    %46 = arith.mulf %45, %44 : vector<8x128xf32>
    %cst_28 = arith.constant 5.000000e-01 : f32
    %47 = vector.broadcast %cst_28 : f32 to vector<8x128xf32>
    %48 = arith.addf %46, %47 : vector<8x128xf32>
    %49 = vector.extract_strided_slice %28 {offsets = [0, 256], sizes = [8, 128], strides = [1, 1]} : vector<8x384xf32> to vector<8x128xf32>
    %50 = vector.extract_strided_slice %24 {offsets = [0, 256], sizes = [8, 128], strides = [1, 1]} : vector<8x384xf32> to vector<8x128xf32>
    %51 = vector.broadcast %17 : vector<1x128xf32> to vector<8x128xf32>
    %52 = arith.addf %50, %51 : vector<8x128xf32>
    %53 = arith.mulf %38, %52 : vector<8x128xf32>
    %54 = arith.addf %49, %53 : vector<8x128xf32>
    %55 = math.tanh %54 : vector<8x128xf32>
    %cst_29 = arith.constant 1.000000e+00 : f32
    %56 = vector.broadcast %cst_29 : f32 to vector<8x128xf32>
    %57 = arith.subf %56, %48 : vector<8x128xf32>
    %58 = arith.mulf %57, %55 : vector<8x128xf32>
    %59 = arith.mulf %48, %18 : vector<8x128xf32>
    %60 = arith.addf %58, %59 : vector<8x128xf32>
    %61 = arith.truncf %60 : vector<8x128xf32> to vector<8x128xbf16>
    %62 = arith.index_cast %22 : i32 to index
    %c0_30 = arith.constant 0 : index
    %c0_31 = arith.constant 0 : index
    %63 = vector.load %arg7[%62, %c0_30, %c0_31] : memref<8x8x128xbf16, #tpu.memory_space<vmem>>, vector<1x8x128xbf16>
    %64 = vector.shape_cast %63 : vector<1x8x128xbf16> to vector<8x128xbf16>
    %65 = vector.shape_cast %61 : vector<8x128xbf16> to vector<1x8x128xbf16>
    tpu.vector_store %arg7[%62, %c0_30, %c0_31], %65 {strides = array<i32>} : memref<8x8x128xbf16, #tpu.memory_space<vmem>>, vector<1x8x128xbf16>,
    %c1_i32 = arith.constant 1 : i32
    %c2_i32_32 = arith.constant 2 : i32
    %66 = arith.muli %c2_i32_32, %c1_i32 : i32
    %c7_i32_33 = arith.constant 7 : i32
    %67 = arith.subi %c7_i32_33, %66 : i32
    %68 = arith.muli %arg0, %67 : i32
    %69 = arith.addi %c1_i32, %68 : i32
    %70 = arith.truncf %60 : vector<8x128xf32> to vector<8x128xbf16>
    %cst_34 = arith.constant dense<0.000000e+00> : vector<8x384xf32>
    %71 = tpu.matmul %70, %15, %cst_34 {dimension_numbers = #tpu.dot_dimension_numbers<[1], [0], [0], [1], [0, 0, 1, 1], [], []>} : vector<8x128xbf16>, vector<128x384xbf16>, vector<8x384xf32> -> vector<8x384xf32>
    %72 = arith.index_cast %69 : i32 to index
    %c0_35 = arith.constant 0 : index
    %c0_36 = arith.constant 0 : index
    %73 = vector.load %arg10[%72, %c0_35, %c0_36] : memref<8x8x384xbf16, #tpu.memory_space<vmem>>, vector<1x8x384xbf16>
    %74 = vector.shape_cast %73 : vector<1x8x384xbf16> to vector<8x384xbf16>
    %75 = arith.extf %74 : vector<8x384xbf16> to vector<8x384xf32>
    %76 = vector.extract_strided_slice %75 {offsets = [0, 0], sizes = [8, 128], strides = [1, 1]} : vector<8x384xf32> to vector<8x128xf32>
    %77 = vector.extract_strided_slice %71 {offsets = [0, 0], sizes = [8, 128], strides = [1, 1]} : vector<8x384xf32> to vector<8x128xf32>
    %78 = arith.addf %76, %77 : vector<8x128xf32>
    %cst_37 = arith.constant 5.000000e-01 : f32
    %79 = vector.broadcast %cst_37 : f32 to vector<8x128xf32>
    %80 = arith.mulf %79, %78 : vector<8x128xf32>
    %81 = math.tanh %80 : vector<8x128xf32>
    %cst_38 = arith.constant 5.000000e-01 : f32
    %82 = vector.broadcast %cst_38 : f32 to vector<8x128xf32>
    %83 = arith.mulf %82, %81 : vector<8x128xf32>
    %cst_39 = arith.constant 5.000000e-01 : f32
    %84 = vector.broadcast %cst_39 : f32 to vector<8x128xf32>
    %85 = arith.addf %83, %84 : vector<8x128xf32>
    %86 = vector.extract_strided_slice %75 {offsets = [0, 128], sizes = [8, 128], strides = [1, 1]} : vector<8x384xf32> to vector<8x128xf32>
    %87 = vector.extract_strided_slice %71 {offsets = [0, 128], sizes = [8, 128], strides = [1, 1]} : vector<8x384xf32> to vector<8x128xf32>
    %88 = arith.addf %86, %87 : vector<8x128xf32>
    %cst_40 = arith.constant 5.000000e-01 : f32
    %89 = vector.broadcast %cst_40 : f32 to vector<8x128xf32>
    %90 = arith.mulf %89, %88 : vector<8x128xf32>
    %91 = math.tanh %90 : vector<8x128xf32>
    %cst_41 = arith.constant 5.000000e-01 : f32
    %92 = vector.broadcast %cst_41 : f32 to vector<8x128xf32>
    %93 = arith.mulf %92, %91 : vector<8x128xf32>
    %cst_42 = arith.constant 5.000000e-01 : f32
    %94 = vector.broadcast %cst_42 : f32 to vector<8x128xf32>
    %95 = arith.addf %93, %94 : vector<8x128xf32>
    %96 = vector.extract_strided_slice %75 {offsets = [0, 256], sizes = [8, 128], strides = [1, 1]} : vector<8x384xf32> to vector<8x128xf32>
    %97 = vector.extract_strided_slice %71 {offsets = [0, 256], sizes = [8, 128], strides = [1, 1]} : vector<8x384xf32> to vector<8x128xf32>
    %98 = vector.broadcast %17 : vector<1x128xf32> to vector<8x128xf32>
    %99 = arith.addf %97, %98 : vector<8x128xf32>
    %100 = arith.mulf %85, %99 : vector<8x128xf32>
    %101 = arith.addf %96, %100 : vector<8x128xf32>
    %102 = math.tanh %101 : vector<8x128xf32>
    %cst_43 = arith.constant 1.000000e+00 : f32
    %103 = vector.broadcast %cst_43 : f32 to vector<8x128xf32>
    %104 = arith.subf %103, %95 : vector<8x128xf32>
    %105 = arith.mulf %104, %102 : vector<8x128xf32>
    %106 = arith.mulf %95, %60 : vector<8x128xf32>
    %107 = arith.addf %105, %106 : vector<8x128xf32>
    %108 = arith.truncf %107 : vector<8x128xf32> to vector<8x128xbf16>
    %109 = arith.index_cast %69 : i32 to index
    %c0_44 = arith.constant 0 : index
    %c0_45 = arith.constant 0 : index
    %110 = vector.load %arg7[%109, %c0_44, %c0_45] : memref<8x8x128xbf16, #tpu.memory_space<vmem>>, vector<1x8x128xbf16>
    %111 = vector.shape_cast %110 : vector<1x8x128xbf16> to vector<8x128xbf16>
    %112 = vector.shape_cast %108 : vector<8x128xbf16> to vector<1x8x128xbf16>
    tpu.vector_store %arg7[%109, %c0_44, %c0_45], %112 {strides = array<i32>} : memref<8x8x128xbf16, #tpu.memory_space<vmem>>, vector<1x8x128xbf16>,
    %c2_i32_46 = arith.constant 2 : i32
    %c2_i32_47 = arith.constant 2 : i32
    %113 = arith.muli %c2_i32_47, %c2_i32_46 : i32
    %c7_i32_48 = arith.constant 7 : i32
    %114 = arith.subi %c7_i32_48, %113 : i32
    %115 = arith.muli %arg0, %114 : i32
    %116 = arith.addi %c2_i32_46, %115 : i32
    %117 = arith.truncf %107 : vector<8x128xf32> to vector<8x128xbf16>
    %cst_49 = arith.constant dense<0.000000e+00> : vector<8x384xf32>
    %118 = tpu.matmul %117, %15, %cst_49 {dimension_numbers = #tpu.dot_dimension_numbers<[1], [0], [0], [1], [0, 0, 1, 1], [], []>} : vector<8x128xbf16>, vector<128x384xbf16>, vector<8x384xf32> -> vector<8x384xf32>
    %119 = arith.index_cast %116 : i32 to index
    %c0_50 = arith.constant 0 : index
    %c0_51 = arith.constant 0 : index
    %120 = vector.load %arg10[%119, %c0_50, %c0_51] : memref<8x8x384xbf16, #tpu.memory_space<vmem>>, vector<1x8x384xbf16>
    %121 = vector.shape_cast %120 : vector<1x8x384xbf16> to vector<8x384xbf16>
    %122 = arith.extf %121 : vector<8x384xbf16> to vector<8x384xf32>
    %123 = vector.extract_strided_slice %122 {offsets = [0, 0], sizes = [8, 128], strides = [1, 1]} : vector<8x384xf32> to vector<8x128xf32>
    %124 = vector.extract_strided_slice %118 {offsets = [0, 0], sizes = [8, 128], strides = [1, 1]} : vector<8x384xf32> to vector<8x128xf32>
    %125 = arith.addf %123, %124 : vector<8x128xf32>
    %cst_52 = arith.constant 5.000000e-01 : f32
    %126 = vector.broadcast %cst_52 : f32 to vector<8x128xf32>
    %127 = arith.mulf %126, %125 : vector<8x128xf32>
    %128 = math.tanh %127 : vector<8x128xf32>
    %cst_53 = arith.constant 5.000000e-01 : f32
    %129 = vector.broadcast %cst_53 : f32 to vector<8x128xf32>
    %130 = arith.mulf %129, %128 : vector<8x128xf32>
    %cst_54 = arith.constant 5.000000e-01 : f32
    %131 = vector.broadcast %cst_54 : f32 to vector<8x128xf32>
    %132 = arith.addf %130, %131 : vector<8x128xf32>
    %133 = vector.extract_strided_slice %122 {offsets = [0, 128], sizes = [8, 128], strides = [1, 1]} : vector<8x384xf32> to vector<8x128xf32>
    %134 = vector.extract_strided_slice %118 {offsets = [0, 128], sizes = [8, 128], strides = [1, 1]} : vector<8x384xf32> to vector<8x128xf32>
    %135 = arith.addf %133, %134 : vector<8x128xf32>
    %cst_55 = arith.constant 5.000000e-01 : f32
    %136 = vector.broadcast %cst_55 : f32 to vector<8x128xf32>
    %137 = arith.mulf %136, %135 : vector<8x128xf32>
    %138 = math.tanh %137 : vector<8x128xf32>
    %cst_56 = arith.constant 5.000000e-01 : f32
    %139 = vector.broadcast %cst_56 : f32 to vector<8x128xf32>
    %140 = arith.mulf %139, %138 : vector<8x128xf32>
    %cst_57 = arith.constant 5.000000e-01 : f32
    %141 = vector.broadcast %cst_57 : f32 to vector<8x128xf32>
    %142 = arith.addf %140, %141 : vector<8x128xf32>
    %143 = vector.extract_strided_slice %122 {offsets = [0, 256], sizes = [8, 128], strides = [1, 1]} : vector<8x384xf32> to vector<8x128xf32>
    %144 = vector.extract_strided_slice %118 {offsets = [0, 256], sizes = [8, 128], strides = [1, 1]} : vector<8x384xf32> to vector<8x128xf32>
    %145 = vector.broadcast %17 : vector<1x128xf32> to vector<8x128xf32>
    %146 = arith.addf %144, %145 : vector<8x128xf32>
    %147 = arith.mulf %132, %146 : vector<8x128xf32>
    %148 = arith.addf %143, %147 : vector<8x128xf32>
    %149 = math.tanh %148 : vector<8x128xf32>
    %cst_58 = arith.constant 1.000000e+00 : f32
    %150 = vector.broadcast %cst_58 : f32 to vector<8x128xf32>
    %151 = arith.subf %150, %142 : vector<8x128xf32>
    %152 = arith.mulf %151, %149 : vector<8x128xf32>
    %153 = arith.mulf %142, %107 : vector<8x128xf32>
    %154 = arith.addf %152, %153 : vector<8x128xf32>
    %155 = arith.truncf %154 : vector<8x128xf32> to vector<8x128xbf16>
    %156 = arith.index_cast %116 : i32 to index
    %c0_59 = arith.constant 0 : index
    %c0_60 = arith.constant 0 : index
    %157 = vector.load %arg7[%156, %c0_59, %c0_60] : memref<8x8x128xbf16, #tpu.memory_space<vmem>>, vector<1x8x128xbf16>
    %158 = vector.shape_cast %157 : vector<1x8x128xbf16> to vector<8x128xbf16>
    %159 = vector.shape_cast %155 : vector<8x128xbf16> to vector<1x8x128xbf16>
    tpu.vector_store %arg7[%156, %c0_59, %c0_60], %159 {strides = array<i32>} : memref<8x8x128xbf16, #tpu.memory_space<vmem>>, vector<1x8x128xbf16>,
    %c3_i32 = arith.constant 3 : i32
    %c2_i32_61 = arith.constant 2 : i32
    %160 = arith.muli %c2_i32_61, %c3_i32 : i32
    %c7_i32_62 = arith.constant 7 : i32
    %161 = arith.subi %c7_i32_62, %160 : i32
    %162 = arith.muli %arg0, %161 : i32
    %163 = arith.addi %c3_i32, %162 : i32
    %164 = arith.truncf %154 : vector<8x128xf32> to vector<8x128xbf16>
    %cst_63 = arith.constant dense<0.000000e+00> : vector<8x384xf32>
    %165 = tpu.matmul %164, %15, %cst_63 {dimension_numbers = #tpu.dot_dimension_numbers<[1], [0], [0], [1], [0, 0, 1, 1], [], []>} : vector<8x128xbf16>, vector<128x384xbf16>, vector<8x384xf32> -> vector<8x384xf32>
    %166 = arith.index_cast %163 : i32 to index
    %c0_64 = arith.constant 0 : index
    %c0_65 = arith.constant 0 : index
    %167 = vector.load %arg10[%166, %c0_64, %c0_65] : memref<8x8x384xbf16, #tpu.memory_space<vmem>>, vector<1x8x384xbf16>
    %168 = vector.shape_cast %167 : vector<1x8x384xbf16> to vector<8x384xbf16>
    %169 = arith.extf %168 : vector<8x384xbf16> to vector<8x384xf32>
    %170 = vector.extract_strided_slice %169 {offsets = [0, 0], sizes = [8, 128], strides = [1, 1]} : vector<8x384xf32> to vector<8x128xf32>
    %171 = vector.extract_strided_slice %165 {offsets = [0, 0], sizes = [8, 128], strides = [1, 1]} : vector<8x384xf32> to vector<8x128xf32>
    %172 = arith.addf %170, %171 : vector<8x128xf32>
    %cst_66 = arith.constant 5.000000e-01 : f32
    %173 = vector.broadcast %cst_66 : f32 to vector<8x128xf32>
    %174 = arith.mulf %173, %172 : vector<8x128xf32>
    %175 = math.tanh %174 : vector<8x128xf32>
    %cst_67 = arith.constant 5.000000e-01 : f32
    %176 = vector.broadcast %cst_67 : f32 to vector<8x128xf32>
    %177 = arith.mulf %176, %175 : vector<8x128xf32>
    %cst_68 = arith.constant 5.000000e-01 : f32
    %178 = vector.broadcast %cst_68 : f32 to vector<8x128xf32>
    %179 = arith.addf %177, %178 : vector<8x128xf32>
    %180 = vector.extract_strided_slice %169 {offsets = [0, 128], sizes = [8, 128], strides = [1, 1]} : vector<8x384xf32> to vector<8x128xf32>
    %181 = vector.extract_strided_slice %165 {offsets = [0, 128], sizes = [8, 128], strides = [1, 1]} : vector<8x384xf32> to vector<8x128xf32>
    %182 = arith.addf %180, %181 : vector<8x128xf32>
    %cst_69 = arith.constant 5.000000e-01 : f32
    %183 = vector.broadcast %cst_69 : f32 to vector<8x128xf32>
    %184 = arith.mulf %183, %182 : vector<8x128xf32>
    %185 = math.tanh %184 : vector<8x128xf32>
    %cst_70 = arith.constant 5.000000e-01 : f32
    %186 = vector.broadcast %cst_70 : f32 to vector<8x128xf32>
    %187 = arith.mulf %186, %185 : vector<8x128xf32>
    %cst_71 = arith.constant 5.000000e-01 : f32
    %188 = vector.broadcast %cst_71 : f32 to vector<8x128xf32>
    %189 = arith.addf %187, %188 : vector<8x128xf32>
    %190 = vector.extract_strided_slice %169 {offsets = [0, 256], sizes = [8, 128], strides = [1, 1]} : vector<8x384xf32> to vector<8x128xf32>
    %191 = vector.extract_strided_slice %165 {offsets = [0, 256], sizes = [8, 128], strides = [1, 1]} : vector<8x384xf32> to vector<8x128xf32>
    %192 = vector.broadcast %17 : vector<1x128xf32> to vector<8x128xf32>
    %193 = arith.addf %191, %192 : vector<8x128xf32>
    %194 = arith.mulf %179, %193 : vector<8x128xf32>
    %195 = arith.addf %190, %194 : vector<8x128xf32>
    %196 = math.tanh %195 : vector<8x128xf32>
    %cst_72 = arith.constant 1.000000e+00 : f32
    %197 = vector.broadcast %cst_72 : f32 to vector<8x128xf32>
    %198 = arith.subf %197, %189 : vector<8x128xf32>
    %199 = arith.mulf %198, %196 : vector<8x128xf32>
    %200 = arith.mulf %189, %154 : vector<8x128xf32>
    %201 = arith.addf %199, %200 : vector<8x128xf32>
    %202 = arith.truncf %201 : vector<8x128xf32> to vector<8x128xbf16>
    %203 = arith.index_cast %163 : i32 to index
    %c0_73 = arith.constant 0 : index
    %c0_74 = arith.constant 0 : index
    %204 = vector.load %arg7[%203, %c0_73, %c0_74] : memref<8x8x128xbf16, #tpu.memory_space<vmem>>, vector<1x8x128xbf16>
    %205 = vector.shape_cast %204 : vector<1x8x128xbf16> to vector<8x128xbf16>
    %206 = vector.shape_cast %202 : vector<8x128xbf16> to vector<1x8x128xbf16>
    tpu.vector_store %arg7[%203, %c0_73, %c0_74], %206 {strides = array<i32>} : memref<8x8x128xbf16, #tpu.memory_space<vmem>>, vector<1x8x128xbf16>,
    %c4_i32 = arith.constant 4 : i32
    %c2_i32_75 = arith.constant 2 : i32
    %207 = arith.muli %c2_i32_75, %c4_i32 : i32
    %c7_i32_76 = arith.constant 7 : i32
    %208 = arith.subi %c7_i32_76, %207 : i32
    %209 = arith.muli %arg0, %208 : i32
    %210 = arith.addi %c4_i32, %209 : i32
    %211 = arith.truncf %201 : vector<8x128xf32> to vector<8x128xbf16>
    %cst_77 = arith.constant dense<0.000000e+00> : vector<8x384xf32>
    %212 = tpu.matmul %211, %15, %cst_77 {dimension_numbers = #tpu.dot_dimension_numbers<[1], [0], [0], [1], [0, 0, 1, 1], [], []>} : vector<8x128xbf16>, vector<128x384xbf16>, vector<8x384xf32> -> vector<8x384xf32>
    %213 = arith.index_cast %210 : i32 to index
    %c0_78 = arith.constant 0 : index
    %c0_79 = arith.constant 0 : index
    %214 = vector.load %arg10[%213, %c0_78, %c0_79] : memref<8x8x384xbf16, #tpu.memory_space<vmem>>, vector<1x8x384xbf16>
    %215 = vector.shape_cast %214 : vector<1x8x384xbf16> to vector<8x384xbf16>
    %216 = arith.extf %215 : vector<8x384xbf16> to vector<8x384xf32>
    %217 = vector.extract_strided_slice %216 {offsets = [0, 0], sizes = [8, 128], strides = [1, 1]} : vector<8x384xf32> to vector<8x128xf32>
    %218 = vector.extract_strided_slice %212 {offsets = [0, 0], sizes = [8, 128], strides = [1, 1]} : vector<8x384xf32> to vector<8x128xf32>
    %219 = arith.addf %217, %218 : vector<8x128xf32>
    %cst_80 = arith.constant 5.000000e-01 : f32
    %220 = vector.broadcast %cst_80 : f32 to vector<8x128xf32>
    %221 = arith.mulf %220, %219 : vector<8x128xf32>
    %222 = math.tanh %221 : vector<8x128xf32>
    %cst_81 = arith.constant 5.000000e-01 : f32
    %223 = vector.broadcast %cst_81 : f32 to vector<8x128xf32>
    %224 = arith.mulf %223, %222 : vector<8x128xf32>
    %cst_82 = arith.constant 5.000000e-01 : f32
    %225 = vector.broadcast %cst_82 : f32 to vector<8x128xf32>
    %226 = arith.addf %224, %225 : vector<8x128xf32>
    %227 = vector.extract_strided_slice %216 {offsets = [0, 128], sizes = [8, 128], strides = [1, 1]} : vector<8x384xf32> to vector<8x128xf32>
    %228 = vector.extract_strided_slice %212 {offsets = [0, 128], sizes = [8, 128], strides = [1, 1]} : vector<8x384xf32> to vector<8x128xf32>
    %229 = arith.addf %227, %228 : vector<8x128xf32>
    %cst_83 = arith.constant 5.000000e-01 : f32
    %230 = vector.broadcast %cst_83 : f32 to vector<8x128xf32>
    %231 = arith.mulf %230, %229 : vector<8x128xf32>
    %232 = math.tanh %231 : vector<8x128xf32>
    %cst_84 = arith.constant 5.000000e-01 : f32
    %233 = vector.broadcast %cst_84 : f32 to vector<8x128xf32>
    %234 = arith.mulf %233, %232 : vector<8x128xf32>
    %cst_85 = arith.constant 5.000000e-01 : f32
    %235 = vector.broadcast %cst_85 : f32 to vector<8x128xf32>
    %236 = arith.addf %234, %235 : vector<8x128xf32>
    %237 = vector.extract_strided_slice %216 {offsets = [0, 256], sizes = [8, 128], strides = [1, 1]} : vector<8x384xf32> to vector<8x128xf32>
    %238 = vector.extract_strided_slice %212 {offsets = [0, 256], sizes = [8, 128], strides = [1, 1]} : vector<8x384xf32> to vector<8x128xf32>
    %239 = vector.broadcast %17 : vector<1x128xf32> to vector<8x128xf32>
    %240 = arith.addf %238, %239 : vector<8x128xf32>
    %241 = arith.mulf %226, %240 : vector<8x128xf32>
    %242 = arith.addf %237, %241 : vector<8x128xf32>
    %243 = math.tanh %242 : vector<8x128xf32>
    %cst_86 = arith.constant 1.000000e+00 : f32
    %244 = vector.broadcast %cst_86 : f32 to vector<8x128xf32>
    %245 = arith.subf %244, %236 : vector<8x128xf32>
    %246 = arith.mulf %245, %243 : vector<8x128xf32>
    %247 = arith.mulf %236, %201 : vector<8x128xf32>
    %248 = arith.addf %246, %247 : vector<8x128xf32>
    %249 = arith.truncf %248 : vector<8x128xf32> to vector<8x128xbf16>
    %250 = arith.index_cast %210 : i32 to index
    %c0_87 = arith.constant 0 : index
    %c0_88 = arith.constant 0 : index
    %251 = vector.load %arg7[%250, %c0_87, %c0_88] : memref<8x8x128xbf16, #tpu.memory_space<vmem>>, vector<1x8x128xbf16>
    %252 = vector.shape_cast %251 : vector<1x8x128xbf16> to vector<8x128xbf16>
    %253 = vector.shape_cast %249 : vector<8x128xbf16> to vector<1x8x128xbf16>
    tpu.vector_store %arg7[%250, %c0_87, %c0_88], %253 {strides = array<i32>} : memref<8x8x128xbf16, #tpu.memory_space<vmem>>, vector<1x8x128xbf16>,
    %c5_i32 = arith.constant 5 : i32
    %c2_i32_89 = arith.constant 2 : i32
    %254 = arith.muli %c2_i32_89, %c5_i32 : i32
    %c7_i32_90 = arith.constant 7 : i32
    %255 = arith.subi %c7_i32_90, %254 : i32
    %256 = arith.muli %arg0, %255 : i32
    %257 = arith.addi %c5_i32, %256 : i32
    %258 = arith.truncf %248 : vector<8x128xf32> to vector<8x128xbf16>
    %cst_91 = arith.constant dense<0.000000e+00> : vector<8x384xf32>
    %259 = tpu.matmul %258, %15, %cst_91 {dimension_numbers = #tpu.dot_dimension_numbers<[1], [0], [0], [1], [0, 0, 1, 1], [], []>} : vector<8x128xbf16>, vector<128x384xbf16>, vector<8x384xf32> -> vector<8x384xf32>
    %260 = arith.index_cast %257 : i32 to index
    %c0_92 = arith.constant 0 : index
    %c0_93 = arith.constant 0 : index
    %261 = vector.load %arg10[%260, %c0_92, %c0_93] : memref<8x8x384xbf16, #tpu.memory_space<vmem>>, vector<1x8x384xbf16>
    %262 = vector.shape_cast %261 : vector<1x8x384xbf16> to vector<8x384xbf16>
    %263 = arith.extf %262 : vector<8x384xbf16> to vector<8x384xf32>
    %264 = vector.extract_strided_slice %263 {offsets = [0, 0], sizes = [8, 128], strides = [1, 1]} : vector<8x384xf32> to vector<8x128xf32>
    %265 = vector.extract_strided_slice %259 {offsets = [0, 0], sizes = [8, 128], strides = [1, 1]} : vector<8x384xf32> to vector<8x128xf32>
    %266 = arith.addf %264, %265 : vector<8x128xf32>
    %cst_94 = arith.constant 5.000000e-01 : f32
    %267 = vector.broadcast %cst_94 : f32 to vector<8x128xf32>
    %268 = arith.mulf %267, %266 : vector<8x128xf32>
    %269 = math.tanh %268 : vector<8x128xf32>
    %cst_95 = arith.constant 5.000000e-01 : f32
    %270 = vector.broadcast %cst_95 : f32 to vector<8x128xf32>
    %271 = arith.mulf %270, %269 : vector<8x128xf32>
    %cst_96 = arith.constant 5.000000e-01 : f32
    %272 = vector.broadcast %cst_96 : f32 to vector<8x128xf32>
    %273 = arith.addf %271, %272 : vector<8x128xf32>
    %274 = vector.extract_strided_slice %263 {offsets = [0, 128], sizes = [8, 128], strides = [1, 1]} : vector<8x384xf32> to vector<8x128xf32>
    %275 = vector.extract_strided_slice %259 {offsets = [0, 128], sizes = [8, 128], strides = [1, 1]} : vector<8x384xf32> to vector<8x128xf32>
    %276 = arith.addf %274, %275 : vector<8x128xf32>
    %cst_97 = arith.constant 5.000000e-01 : f32
    %277 = vector.broadcast %cst_97 : f32 to vector<8x128xf32>
    %278 = arith.mulf %277, %276 : vector<8x128xf32>
    %279 = math.tanh %278 : vector<8x128xf32>
    %cst_98 = arith.constant 5.000000e-01 : f32
    %280 = vector.broadcast %cst_98 : f32 to vector<8x128xf32>
    %281 = arith.mulf %280, %279 : vector<8x128xf32>
    %cst_99 = arith.constant 5.000000e-01 : f32
    %282 = vector.broadcast %cst_99 : f32 to vector<8x128xf32>
    %283 = arith.addf %281, %282 : vector<8x128xf32>
    %284 = vector.extract_strided_slice %263 {offsets = [0, 256], sizes = [8, 128], strides = [1, 1]} : vector<8x384xf32> to vector<8x128xf32>
    %285 = vector.extract_strided_slice %259 {offsets = [0, 256], sizes = [8, 128], strides = [1, 1]} : vector<8x384xf32> to vector<8x128xf32>
    %286 = vector.broadcast %17 : vector<1x128xf32> to vector<8x128xf32>
    %287 = arith.addf %285, %286 : vector<8x128xf32>
    %288 = arith.mulf %273, %287 : vector<8x128xf32>
    %289 = arith.addf %284, %288 : vector<8x128xf32>
    %290 = math.tanh %289 : vector<8x128xf32>
    %cst_100 = arith.constant 1.000000e+00 : f32
    %291 = vector.broadcast %cst_100 : f32 to vector<8x128xf32>
    %292 = arith.subf %291, %283 : vector<8x128xf32>
    %293 = arith.mulf %292, %290 : vector<8x128xf32>
    %294 = arith.mulf %283, %248 : vector<8x128xf32>
    %295 = arith.addf %293, %294 : vector<8x128xf32>
    %296 = arith.truncf %295 : vector<8x128xf32> to vector<8x128xbf16>
    %297 = arith.index_cast %257 : i32 to index
    %c0_101 = arith.constant 0 : index
    %c0_102 = arith.constant 0 : index
    %298 = vector.load %arg7[%297, %c0_101, %c0_102] : memref<8x8x128xbf16, #tpu.memory_space<vmem>>, vector<1x8x128xbf16>
    %299 = vector.shape_cast %298 : vector<1x8x128xbf16> to vector<8x128xbf16>
    %300 = vector.shape_cast %296 : vector<8x128xbf16> to vector<1x8x128xbf16>
    tpu.vector_store %arg7[%297, %c0_101, %c0_102], %300 {strides = array<i32>} : memref<8x8x128xbf16, #tpu.memory_space<vmem>>, vector<1x8x128xbf16>,
    %c6_i32 = arith.constant 6 : i32
    %c2_i32_103 = arith.constant 2 : i32
    %301 = arith.muli %c2_i32_103, %c6_i32 : i32
    %c7_i32_104 = arith.constant 7 : i32
    %302 = arith.subi %c7_i32_104, %301 : i32
    %303 = arith.muli %arg0, %302 : i32
    %304 = arith.addi %c6_i32, %303 : i32
    %305 = arith.truncf %295 : vector<8x128xf32> to vector<8x128xbf16>
    %cst_105 = arith.constant dense<0.000000e+00> : vector<8x384xf32>
    %306 = tpu.matmul %305, %15, %cst_105 {dimension_numbers = #tpu.dot_dimension_numbers<[1], [0], [0], [1], [0, 0, 1, 1], [], []>} : vector<8x128xbf16>, vector<128x384xbf16>, vector<8x384xf32> -> vector<8x384xf32>
    %307 = arith.index_cast %304 : i32 to index
    %c0_106 = arith.constant 0 : index
    %c0_107 = arith.constant 0 : index
    %308 = vector.load %arg10[%307, %c0_106, %c0_107] : memref<8x8x384xbf16, #tpu.memory_space<vmem>>, vector<1x8x384xbf16>
    %309 = vector.shape_cast %308 : vector<1x8x384xbf16> to vector<8x384xbf16>
    %310 = arith.extf %309 : vector<8x384xbf16> to vector<8x384xf32>
    %311 = vector.extract_strided_slice %310 {offsets = [0, 0], sizes = [8, 128], strides = [1, 1]} : vector<8x384xf32> to vector<8x128xf32>
    %312 = vector.extract_strided_slice %306 {offsets = [0, 0], sizes = [8, 128], strides = [1, 1]} : vector<8x384xf32> to vector<8x128xf32>
    %313 = arith.addf %311, %312 : vector<8x128xf32>
    %cst_108 = arith.constant 5.000000e-01 : f32
    %314 = vector.broadcast %cst_108 : f32 to vector<8x128xf32>
    %315 = arith.mulf %314, %313 : vector<8x128xf32>
    %316 = math.tanh %315 : vector<8x128xf32>
    %cst_109 = arith.constant 5.000000e-01 : f32
    %317 = vector.broadcast %cst_109 : f32 to vector<8x128xf32>
    %318 = arith.mulf %317, %316 : vector<8x128xf32>
    %cst_110 = arith.constant 5.000000e-01 : f32
    %319 = vector.broadcast %cst_110 : f32 to vector<8x128xf32>
    %320 = arith.addf %318, %319 : vector<8x128xf32>
    %321 = vector.extract_strided_slice %310 {offsets = [0, 128], sizes = [8, 128], strides = [1, 1]} : vector<8x384xf32> to vector<8x128xf32>
    %322 = vector.extract_strided_slice %306 {offsets = [0, 128], sizes = [8, 128], strides = [1, 1]} : vector<8x384xf32> to vector<8x128xf32>
    %323 = arith.addf %321, %322 : vector<8x128xf32>
    %cst_111 = arith.constant 5.000000e-01 : f32
    %324 = vector.broadcast %cst_111 : f32 to vector<8x128xf32>
    %325 = arith.mulf %324, %323 : vector<8x128xf32>
    %326 = math.tanh %325 : vector<8x128xf32>
    %cst_112 = arith.constant 5.000000e-01 : f32
    %327 = vector.broadcast %cst_112 : f32 to vector<8x128xf32>
    %328 = arith.mulf %327, %326 : vector<8x128xf32>
    %cst_113 = arith.constant 5.000000e-01 : f32
    %329 = vector.broadcast %cst_113 : f32 to vector<8x128xf32>
    %330 = arith.addf %328, %329 : vector<8x128xf32>
    %331 = vector.extract_strided_slice %310 {offsets = [0, 256], sizes = [8, 128], strides = [1, 1]} : vector<8x384xf32> to vector<8x128xf32>
    %332 = vector.extract_strided_slice %306 {offsets = [0, 256], sizes = [8, 128], strides = [1, 1]} : vector<8x384xf32> to vector<8x128xf32>
    %333 = vector.broadcast %17 : vector<1x128xf32> to vector<8x128xf32>
    %334 = arith.addf %332, %333 : vector<8x128xf32>
    %335 = arith.mulf %320, %334 : vector<8x128xf32>
    %336 = arith.addf %331, %335 : vector<8x128xf32>
    %337 = math.tanh %336 : vector<8x128xf32>
    %cst_114 = arith.constant 1.000000e+00 : f32
    %338 = vector.broadcast %cst_114 : f32 to vector<8x128xf32>
    %339 = arith.subf %338, %330 : vector<8x128xf32>
    %340 = arith.mulf %339, %337 : vector<8x128xf32>
    %341 = arith.mulf %330, %295 : vector<8x128xf32>
    %342 = arith.addf %340, %341 : vector<8x128xf32>
    %343 = arith.truncf %342 : vector<8x128xf32> to vector<8x128xbf16>
    %344 = arith.index_cast %304 : i32 to index
    %c0_115 = arith.constant 0 : index
    %c0_116 = arith.constant 0 : index
    %345 = vector.load %arg7[%344, %c0_115, %c0_116] : memref<8x8x128xbf16, #tpu.memory_space<vmem>>, vector<1x8x128xbf16>
    %346 = vector.shape_cast %345 : vector<1x8x128xbf16> to vector<8x128xbf16>
    %347 = vector.shape_cast %343 : vector<8x128xbf16> to vector<1x8x128xbf16>
    tpu.vector_store %arg7[%344, %c0_115, %c0_116], %347 {strides = array<i32>} : memref<8x8x128xbf16, #tpu.memory_space<vmem>>, vector<1x8x128xbf16>,
    %c7_i32_117 = arith.constant 7 : i32
    %c2_i32_118 = arith.constant 2 : i32
    %348 = arith.muli %c2_i32_118, %c7_i32_117 : i32
    %c7_i32_119 = arith.constant 7 : i32
    %349 = arith.subi %c7_i32_119, %348 : i32
    %350 = arith.muli %arg0, %349 : i32
    %351 = arith.addi %c7_i32_117, %350 : i32
    %352 = arith.truncf %342 : vector<8x128xf32> to vector<8x128xbf16>
    %cst_120 = arith.constant dense<0.000000e+00> : vector<8x384xf32>
    %353 = tpu.matmul %352, %15, %cst_120 {dimension_numbers = #tpu.dot_dimension_numbers<[1], [0], [0], [1], [0, 0, 1, 1], [], []>} : vector<8x128xbf16>, vector<128x384xbf16>, vector<8x384xf32> -> vector<8x384xf32>
    %354 = arith.index_cast %351 : i32 to index
    %c0_121 = arith.constant 0 : index
    %c0_122 = arith.constant 0 : index
    %355 = vector.load %arg10[%354, %c0_121, %c0_122] : memref<8x8x384xbf16, #tpu.memory_space<vmem>>, vector<1x8x384xbf16>
    %356 = vector.shape_cast %355 : vector<1x8x384xbf16> to vector<8x384xbf16>
    %357 = arith.extf %356 : vector<8x384xbf16> to vector<8x384xf32>
    %358 = vector.extract_strided_slice %357 {offsets = [0, 0], sizes = [8, 128], strides = [1, 1]} : vector<8x384xf32> to vector<8x128xf32>
    %359 = vector.extract_strided_slice %353 {offsets = [0, 0], sizes = [8, 128], strides = [1, 1]} : vector<8x384xf32> to vector<8x128xf32>
    %360 = arith.addf %358, %359 : vector<8x128xf32>
    %cst_123 = arith.constant 5.000000e-01 : f32
    %361 = vector.broadcast %cst_123 : f32 to vector<8x128xf32>
    %362 = arith.mulf %361, %360 : vector<8x128xf32>
    %363 = math.tanh %362 : vector<8x128xf32>
    %cst_124 = arith.constant 5.000000e-01 : f32
    %364 = vector.broadcast %cst_124 : f32 to vector<8x128xf32>
    %365 = arith.mulf %364, %363 : vector<8x128xf32>
    %cst_125 = arith.constant 5.000000e-01 : f32
    %366 = vector.broadcast %cst_125 : f32 to vector<8x128xf32>
    %367 = arith.addf %365, %366 : vector<8x128xf32>
    %368 = vector.extract_strided_slice %357 {offsets = [0, 128], sizes = [8, 128], strides = [1, 1]} : vector<8x384xf32> to vector<8x128xf32>
    %369 = vector.extract_strided_slice %353 {offsets = [0, 128], sizes = [8, 128], strides = [1, 1]} : vector<8x384xf32> to vector<8x128xf32>
    %370 = arith.addf %368, %369 : vector<8x128xf32>
    %cst_126 = arith.constant 5.000000e-01 : f32
    %371 = vector.broadcast %cst_126 : f32 to vector<8x128xf32>
    %372 = arith.mulf %371, %370 : vector<8x128xf32>
    %373 = math.tanh %372 : vector<8x128xf32>
    %cst_127 = arith.constant 5.000000e-01 : f32
    %374 = vector.broadcast %cst_127 : f32 to vector<8x128xf32>
    %375 = arith.mulf %374, %373 : vector<8x128xf32>
    %cst_128 = arith.constant 5.000000e-01 : f32
    %376 = vector.broadcast %cst_128 : f32 to vector<8x128xf32>
    %377 = arith.addf %375, %376 : vector<8x128xf32>
    %378 = vector.extract_strided_slice %357 {offsets = [0, 256], sizes = [8, 128], strides = [1, 1]} : vector<8x384xf32> to vector<8x128xf32>
    %379 = vector.extract_strided_slice %353 {offsets = [0, 256], sizes = [8, 128], strides = [1, 1]} : vector<8x384xf32> to vector<8x128xf32>
    %380 = vector.broadcast %17 : vector<1x128xf32> to vector<8x128xf32>
    %381 = arith.addf %379, %380 : vector<8x128xf32>
    %382 = arith.mulf %367, %381 : vector<8x128xf32>
    %383 = arith.addf %378, %382 : vector<8x128xf32>
    %384 = math.tanh %383 : vector<8x128xf32>
    %cst_129 = arith.constant 1.000000e+00 : f32
    %385 = vector.broadcast %cst_129 : f32 to vector<8x128xf32>
    %386 = arith.subf %385, %377 : vector<8x128xf32>
    %387 = arith.mulf %386, %384 : vector<8x128xf32>
    %388 = arith.mulf %377, %342 : vector<8x128xf32>
    %389 = arith.addf %387, %388 : vector<8x128xf32>
    %390 = arith.truncf %389 : vector<8x128xf32> to vector<8x128xbf16>
    %391 = arith.index_cast %351 : i32 to index
    %c0_130 = arith.constant 0 : index
    %c0_131 = arith.constant 0 : index
    %392 = vector.load %arg7[%391, %c0_130, %c0_131] : memref<8x8x128xbf16, #tpu.memory_space<vmem>>, vector<1x8x128xbf16>
    %393 = vector.shape_cast %392 : vector<1x8x128xbf16> to vector<8x128xbf16>
    %394 = vector.shape_cast %390 : vector<8x128xbf16> to vector<1x8x128xbf16>
    tpu.vector_store %arg7[%391, %c0_130, %c0_131], %394 {strides = array<i32>} : memref<8x8x128xbf16, #tpu.memory_space<vmem>>, vector<1x8x128xbf16>,
    %c8_i32 = arith.constant 8 : i32
    %c0_132 = arith.constant 0 : index
    %c0_133 = arith.constant 0 : index
    %395 = vector.load %arg9[%c0_132, %c0_133] : memref<8x128xf32, #tpu.memory_space<vmem>>, vector<8x128xf32>
    tpu.vector_store %arg9[%c0_132, %c0_133], %389 {strides = array<i32>} : memref<8x128xf32, #tpu.memory_space<vmem>>, vector<8x128xf32>,
    %c0_i32_134 = arith.constant 0 : i32
    %396 = arith.cmpi eq, %arg1, %c0_i32_134 : i32
    %397 = arith.extui %396 : i1 to i32
    %c0_i32_135 = arith.constant 0 : i32
    %398 = arith.cmpi ne, %397, %c0_i32_135 : i32
    scf.if %398 {
      %c0_136 = arith.constant 0 : index
      %c0_137 = arith.constant 0 : index
      %c0_138 = arith.constant 0 : index
      %399 = vector.load %arg8[%c0_136, %c0_137, %c0_138] : memref<1x8x128xf32, #tpu.memory_space<vmem>>, vector<1x8x128xf32>
      %400 = vector.shape_cast %399 : vector<1x8x128xf32> to vector<8x128xf32>
      %401 = vector.shape_cast %389 : vector<8x128xf32> to vector<1x8x128xf32>
      tpu.vector_store %arg8[%c0_136, %c0_137, %c0_138], %401 {strides = array<i32>} : memref<1x8x128xf32, #tpu.memory_space<vmem>>, vector<1x8x128xf32>,
    } else {
    }
    return
  }
  func.func @transform_0(%arg0: i32, %arg1: i32) -> (i32, i32) {
    %c2_i32 = arith.constant 2 : i32
    %0 = arith.muli %c2_i32, %arg1 : i32
    %c0_i32 = arith.constant 0 : i32
    %1 = arith.subi %c0_i32, %0 : i32
    %2 = arith.muli %arg0, %1 : i32
    %3 = arith.addi %arg1, %2 : i32
    %c0_i32_0 = arith.constant 0 : i32
    %c0_i32_1 = arith.constant 0 : i32
    return %3, %c0_i32_0 : i32, i32
  }
  func.func @transform_1(%arg0: i32, %arg1: i32) -> (i32, i32, i32) {
    %c0_i32 = arith.constant 0 : i32
    %c0_i32_0 = arith.constant 0 : i32
    %c0_i32_1 = arith.constant 0 : i32
    return %arg0, %c0_i32, %c0_i32_0 : i32, i32, i32
  }
  func.func @transform_2(%arg0: i32, %arg1: i32) -> (i32, i32, i32) {
    %c0_i32 = arith.constant 0 : i32
    %c0_i32_0 = arith.constant 0 : i32
    %c0_i32_1 = arith.constant 0 : i32
    return %arg0, %c0_i32, %c0_i32_0 : i32, i32, i32
  }
  func.func @transform_3(%arg0: i32, %arg1: i32) -> (i32, i32, i32) {
    %c0_i32 = arith.constant 0 : i32
    %c0_i32_0 = arith.constant 0 : i32
    %c0_i32_1 = arith.constant 0 : i32
    return %arg0, %c0_i32, %c0_i32_0 : i32, i32, i32
  }
  func.func @transform_4(%arg0: i32, %arg1: i32) -> (i32, i32, i32) {
    %c0_i32 = arith.constant 0 : i32
    %c0_i32_0 = arith.constant 0 : i32
    %c0_i32_1 = arith.constant 0 : i32
    return %arg0, %c0_i32, %c0_i32_0 : i32, i32, i32
  }
  func.func @transform_5(%arg0: i32, %arg1: i32) -> (i32, i32, i32) {
    %c2_i32 = arith.constant 2 : i32
    %0 = arith.muli %c2_i32, %arg1 : i32
    %c0_i32 = arith.constant 0 : i32
    %1 = arith.subi %c0_i32, %0 : i32
    %2 = arith.muli %arg0, %1 : i32
    %3 = arith.addi %arg1, %2 : i32
    %c0_i32_0 = arith.constant 0 : i32
    %c0_i32_1 = arith.constant 0 : i32
    return %3, %c0_i32_0, %arg0 : i32, i32, i32
  }
  func.func @transform_6(%arg0: i32, %arg1: i32) -> (i32, i32, i32) {
    %c0_i32 = arith.constant 0 : i32
    %c0_i32_0 = arith.constant 0 : i32
    %c0_i32_1 = arith.constant 0 : i32
    return %arg0, %c0_i32, %c0_i32_0 : i32, i32, i32
  }
}

</mosaic_0001>

<llo_original>
// kernel: tpu_custom_call.1
$region0: #{tpu_custom_call.1}
  #allocation0 [shape = 'u32[]', space=smem, size = 0x4, offset = 0x4, fixed_abs, tag = 'smem constant byte address 0x4 - core index']
  #allocation1 [shape = 'u32[144,128]{1,0:T(1,128)}', space=vmem, size = 0x12000, scoped, tag = 'internal scratch']
  #allocation2 [shape = 'f32[8,128]{1,0:T(8,128)}', space=vmem, size = 0x1000, scoped, tag = 'scratch operand']
  #allocation3 [shape = 'bf16[8,8,384]{2,1,0:T(8,128)(2,1)}', space=vmem, size = 0xc000, scoped, tag = 'scratch operand']
  %s0 = inlined_call_operand.vmem [shape: bf16[64,32], index: 0, kind: input, shape index: {}]
  %s1 = inlined_call_operand.hbm [shape: bf16[2,32,384], index: 1, kind: input, shape index: {}]
  %s2 = inlined_call_operand.hbm [shape: bf16[2,128,384], index: 2, kind: input, shape index: {}]
  %s3 = inlined_call_operand.vmem [shape: f32[2,1,384], index: 3, kind: input, shape index: {}]
  %s4 = inlined_call_operand.vmem [shape: f32[2,1,128], index: 4, kind: input, shape index: {}]
  %s5 = inlined_call_operand.hbm [shape: bf16[8,8,256], index: 5, kind: output, shape index: {0}]
  %s6 = inlined_call_operand.hbm [shape: f32[2,8,128], index: 6, kind: output, shape index: {1}]
  %7 = xla_tuple %s5, %s6
  %s8 = sld [smem:[#allocation0]]
  $region77: #{tpu_custom_call.1} parent=0
    _
  %s10 = ssub.s32 1, %s8
  %s11 = scalar_select 0, %s10, %s8
  $region1: #{tpu_custom_call.1} parent=0
    #allocation4 [shape = 'u8[49152]{0}', space=vmem, size = 0xc000, scoped, tag = 'input window, operand 1']
    #allocation5 [shape = 's32[2]{0}', space=sflag, size = 0x8, scoped, tag = 'scoped memory for tpu_custom_call.1']
    #allocation6 [shape = 's32[2]{0}', space=sflag, size = 0x8, scoped, tag = 'scoped memory for tpu_custom_call.1']
    #allocation7 [shape = 'u8[196608]{0}', space=vmem, size = 0x30000, scoped, tag = 'input window, operand 2']
    #allocation8 [shape = 's32[2]{0}', space=sflag, size = 0x8, scoped, tag = 'scoped memory for tpu_custom_call.1']
    #allocation9 [shape = 'u8[32768]{0}', space=vmem, size = 0x8000, scoped, tag = 'output window, operand 0']
    #allocation10 [shape = 'u8[8192]{0}', space=vmem, size = 0x2000, scoped, tag = 'output window, operand 1']
    #allocation11 [shape = 's32[2]{0}', space=sflag, size = 0x8, scoped, tag = 'scoped memory for tpu_custom_call.1']
    %12 = vsyncpa [#allocation5], 0
    %s13 = scalar_lea.sflag [#allocation5], 1
    %14 = vsyncpa %s13, 0
    %15 = vsyncpa [#allocation8], 0
    %s16 = scalar_lea.sflag [#allocation8], 1
    %17 = vsyncpa %s16, 0
    %18 = vsyncpa [#allocation6], 0
    %s19 = scalar_lea.sflag [#allocation6], 1
    %20 = vsyncpa %s19, 0
    %21 = vsyncpa [#allocation11], 0
    %s22 = scalar_lea.sflag [#allocation11], 1
    %23 = vsyncpa %s22, 0
    loop: start=0, step=1, limit=4
    $region2: #{tpu_custom_call.1} parent=1 // loop_pre_header
      _
    $region3: #{tpu_custom_call.1} parent=1 // loop_header
      %s25 = sphi 0, %s29
      %p26 = scmp.ge.s32.totalorder %s25, 4
      %s32 = sphi 0, %s44
      %s33 = sphi 0, %s40
      %s34 = sphi 0, %s32
      %s35 = sphi 0, %s33
      %s36 = sphi 0, %s34
      %s37 = sphi 0, %s35
      %s55 = sphi 0, %s57
      %s58 = sphi 0, %s55
      %s59 = sphi 0, %s58
      %s75 = sphi 0, %s59
      %s81 = sphi 0, %s83
      %s84 = sphi 0, %s81
      %s85 = sphi 0, %s84
      %s101 = sphi 0, %s85
      %s107 = sphi 0, %s109
      %s110 = sphi 0, %s107
      %s111 = sphi 0, %s110
      %s127 = sphi 0, %s111
      %s133 = sphi 0, %s135
      %s136 = sphi 0, %s133
      %s137 = sphi 0, %s136
      %s153 = sphi 0, %s137
      %s159 = sphi 0, %s161
      %s162 = sphi 0, %s159
      %s163 = sphi 0, %s162
      %s179 = sphi 0, %s163
      %s195 = sphi 0, %s197
      %s198 = sphi 0, %s195
      %s199 = sphi 0, %s198
      %s215 = sphi 0, %s199
      %s221 = sphi 0, %s223
      %s224 = sphi 0, %s221
      %s225 = sphi 0, %s224
      %s241 = sphi 0, %s225
    $region4: #{tpu_custom_call.1} parent=1 // loop_header_branch
      %28 = sbr.rel (%p26) target = $region8
    $region5: #{tpu_custom_call.1} parent=1 // loop_body
      %s30 = ssub.s32 %s25, 1
      %s31 = ssub.s32 %s25, 2
      %s38 = sadd.s32 1, %s33
      %p39 = scmp.ge.s32.totalorder %s38, 1
      %s40 = scalar_select %p39, 0, %s38
      %s41 = sadd.s32 1, %s32
      %s42 = scalar_select %p39, %s41, %s32
      %p43 = scmp.ge.s32.totalorder %s42, 2
      %s44 = scalar_select %p43, 0, %s42
      %s45 = smul.u32 %s33, 2
      %s46 = ssub.s32 0, %s45
      %s47 = smul.u32 %s32, %s46
      %s48 = sadd.s32 %s33, %s47
      %s49 = smul.u32 %s40, 2
      %s50 = ssub.s32 0, %s49
      %s51 = smul.u32 %s44, %s50
      %s52 = sadd.s32 %s40, %s51
      %s53 = ssub.s32 %s48, %s52
      %p54 = scmp.eq.s32.totalorder %s53, 0
      %s56 = sadd.s32 %s55, 1
      %s57 = scalar_select %p54, %s55, %s56
      %p60 = pneg %p54
      %p61 = scmp.eq.s32.totalorder %s25, 1
      %p62 = por %p60, %p61
      %p63 = scmp.ne.s32.totalorder %s55, %s58
      %p64 = scmp.eq.s32.totalorder %s25, 0
      %p65 = por %p63, %p64
      %p66 = scmp.ne.s32.totalorder %s55, %s58
      %p67 = scmp.eq.s32.totalorder %s30, 1
      %p68 = por %p66, %p67
      %p69 = scmp.ne.s32.totalorder %s58, %s59
      %p70 = scmp.eq.s32.totalorder %s30, 0
      %p71 = por %p69, %p70
      %p72 = scmp.ne.s32.totalorder %s58, %s59
      %p73 = scmp.eq.s32.totalorder %s31, 1
      %p74 = por %p72, %p73
      %p76 = scmp.ne.s32.totalorder %s59, %s75
      %p77 = scmp.eq.s32.totalorder %s31, 0
      %p78 = por %p76, %p77
      %s79 = ssub.s32 %s32, %s44
      %p80 = scmp.eq.s32.totalorder %s79, 0
      %s82 = sadd.s32 %s81, 1
      %s83 = scalar_select %p80, %s81, %s82
      %p86 = pneg %p80
      %p87 = scmp.eq.s32.totalorder %s25, 1
      %p88 = por %p86, %p87
      %p89 = scmp.ne.s32.totalorder %s81, %s84
      %p90 = scmp.eq.s32.totalorder %s25, 0
      %p91 = por %p89, %p90
      %p92 = scmp.ne.s32.totalorder %s81, %s84
      %p93 = scmp.eq.s32.totalorder %s30, 1
      %p94 = por %p92, %p93
      %p95 = scmp.ne.s32.totalorder %s84, %s85
      %p96 = scmp.eq.s32.totalorder %s30, 0
      %p97 = por %p95, %p96
      %p98 = scmp.ne.s32.totalorder %s84, %s85
      %p99 = scmp.eq.s32.totalorder %s31, 1
      %p100 = por %p98, %p99
      %p102 = scmp.ne.s32.totalorder %s85, %s101
      %p103 = scmp.eq.s32.totalorder %s31, 0
      %p104 = por %p102, %p103
      %s105 = ssub.s32 %s32, %s44
      %p106 = scmp.eq.s32.totalorder %s105, 0
      %s108 = sadd.s32 %s107, 1
      %s109 = scalar_select %p106, %s107, %s108
      %p112 = pneg %p106
      %p113 = scmp.eq.s32.totalorder %s25, 1
      %p114 = por %p112, %p113
      %p115 = scmp.ne.s32.totalorder %s107, %s110
      %p116 = scmp.eq.s32.totalorder %s25, 0
      %p117 = por %p115, %p116
      %p118 = scmp.ne.s32.totalorder %s107, %s110
      %p119 = scmp.eq.s32.totalorder %s30, 1
      %p120 = por %p118, %p119
      %p121 = scmp.ne.s32.totalorder %s110, %s111
      %p122 = scmp.eq.s32.totalorder %s30, 0
      %p123 = por %p121, %p122
      %p124 = scmp.ne.s32.totalorder %s110, %s111
      %p125 = scmp.eq.s32.totalorder %s31, 1
      %p126 = por %p124, %p125
      %p128 = scmp.ne.s32.totalorder %s111, %s127
      %p129 = scmp.eq.s32.totalorder %s31, 0
      %p130 = por %p128, %p129
      %s131 = ssub.s32 %s32, %s44
      %p132 = scmp.eq.s32.totalorder %s131, 0
      %s134 = sadd.s32 %s133, 1
      %s135 = scalar_select %p132, %s133, %s134
      %p138 = pneg %p132
      %p139 = scmp.eq.s32.totalorder %s25, 1
      %p140 = por %p138, %p139
      %p141 = scmp.ne.s32.totalorder %s133, %s136
      %p142 = scmp.eq.s32.totalorder %s25, 0
      %p143 = por %p141, %p142
      %p144 = scmp.ne.s32.totalorder %s133, %s136
      %p145 = scmp.eq.s32.totalorder %s30, 1
      %p146 = por %p144, %p145
      %p147 = scmp.ne.s32.totalorder %s136, %s137
      %p148 = scmp.eq.s32.totalorder %s30, 0
      %p149 = por %p147, %p148
      %p150 = scmp.ne.s32.totalorder %s136, %s137
      %p151 = scmp.eq.s32.totalorder %s31, 1
      %p152 = por %p150, %p151
      %p154 = scmp.ne.s32.totalorder %s137, %s153
      %p155 = scmp.eq.s32.totalorder %s31, 0
      %p156 = por %p154, %p155
      %s157 = ssub.s32 %s32, %s44
      %p158 = scmp.eq.s32.totalorder %s157, 0
      %s160 = sadd.s32 %s159, 1
      %s161 = scalar_select %p158, %s159, %s160
      %p164 = pneg %p158
      %p165 = scmp.eq.s32.totalorder %s25, 1
      %p166 = por %p164, %p165
      %p167 = scmp.ne.s32.totalorder %s159, %s162
      %p168 = scmp.eq.s32.totalorder %s25, 0
      %p169 = por %p167, %p168
      %p170 = scmp.ne.s32.totalorder %s159, %s162
      %p171 = scmp.eq.s32.totalorder %s30, 1
      %p172 = por %p170, %p171
      %p173 = scmp.ne.s32.totalorder %s162, %s163
      %p174 = scmp.eq.s32.totalorder %s30, 0
      %p175 = por %p173, %p174
      %p176 = scmp.ne.s32.totalorder %s162, %s163
      %p177 = scmp.eq.s32.totalorder %s31, 1
      %p178 = por %p176, %p177
      %p180 = scmp.ne.s32.totalorder %s163, %s179
      %p181 = scmp.eq.s32.totalorder %s31, 0
      %p182 = por %p180, %p181
      %s183 = smul.u32 %s33, 2
      %s184 = ssub.s32 0, %s183
      %s185 = smul.u32 %s32, %s184
      %s186 = sadd.s32 %s33, %s185
      %s187 = smul.u32 %s40, 2
      %s188 = ssub.s32 0, %s187
      %s189 = smul.u32 %s44, %s188
      %s190 = sadd.s32 %s40, %s189
      %s191 = ssub.s32 %s186, %s190
      %s192 = ssub.s32 %s32, %s44
      %s193 = sor.u32 %s191, %s192
      %p194 = scmp.eq.s32.totalorder %s193, 0
      %s196 = sadd.s32 %s195, 1
      %s197 = scalar_select %p194, %s195, %s196
      %p200 = pneg %p194
      %p201 = scmp.eq.s32.totalorder %s25, 1
      %p202 = por %p200, %p201
      %p203 = scmp.ne.s32.totalorder %s195, %s198
      %p204 = scmp.eq.s32.totalorder %s25, 0
      %p205 = por %p203, %p204
      %p206 = scmp.ne.s32.totalorder %s195, %s198
      %p207 = scmp.eq.s32.totalorder %s30, 1
      %p208 = por %p206, %p207
      %p209 = scmp.ne.s32.totalorder %s198, %s199
      %p210 = scmp.eq.s32.totalorder %s30, 0
      %p211 = por %p209, %p210
      %p212 = scmp.ne.s32.totalorder %s198, %s199
      %p213 = scmp.eq.s32.totalorder %s31, 1
      %p214 = por %p212, %p213
      %p216 = scmp.ne.s32.totalorder %s199, %s215
      %p217 = scmp.eq.s32.totalorder %s31, 0
      %p218 = por %p216, %p217
      %s219 = ssub.s32 %s32, %s44
      %p220 = scmp.eq.s32.totalorder %s219, 0
      %s222 = sadd.s32 %s221, 1
      %s223 = scalar_select %p220, %s221, %s222
      %p226 = pneg %p220
      %p227 = scmp.eq.s32.totalorder %s25, 1
      %p228 = por %p226, %p227
      %p229 = scmp.ne.s32.totalorder %s221, %s224
      %p230 = scmp.eq.s32.totalorder %s25, 0
      %p231 = por %p229, %p230
      %p232 = scmp.ne.s32.totalorder %s221, %s224
      %p233 = scmp.eq.s32.totalorder %s30, 1
      %p234 = por %p232, %p233
      %p235 = scmp.ne.s32.totalorder %s224, %s225
      %p236 = scmp.eq.s32.totalorder %s30, 0
      %p237 = por %p235, %p236
      %p238 = scmp.ne.s32.totalorder %s224, %s225
      %p239 = scmp.eq.s32.totalorder %s31, 1
      %p240 = por %p238, %p239
      %p242 = scmp.ne.s32.totalorder %s225, %s241
      %p243 = scmp.eq.s32.totalorder %s31, 0
      %p244 = por %p242, %p243
      %p245 = scmp.le.s32.totalorder 1, %s25
      %p246 = scmp.lt.s32.totalorder %s25, 3
      %p247 = pnand %p245, %p246
      %p248 = pneg %p247
      // Predicated region
      $region9: #{tpu_custom_call.1} parent=5 // pred_check
        _
      $region10: #{tpu_custom_call.1} parent=5 // pred_check_branch
        %250 = sbr.rel (%p247) target = $region12
      $region11: #{tpu_custom_call.1} parent=5 // pred_region
        %s251 = ssub.s32 %s25, 1
      $region12: #{tpu_custom_call.1} parent=5 // pred_fallthru
        _
      %p252 = scmp.lt.s32.totalorder %s25, 2
      // Predicated region
      $region13: #{tpu_custom_call.1} parent=5 // pred_check
        %p253 = pneg %p252
      $region14: #{tpu_custom_call.1} parent=5 // pred_check_branch
        %255 = sbr.rel (%p253) target = $region16
      $region15: #{tpu_custom_call.1} parent=5 // pred_region
        // Predicated region
        $region17: #{tpu_custom_call.1} parent=15 // pred_check
          %p256 = pneg %p65
        $region18: #{tpu_custom_call.1} parent=15 // pred_check_branch
          %258 = sbr.rel (%p256) target = $region20
        $region19: #{tpu_custom_call.1} parent=15 // pred_region
          %s259 = smul.u32 %s33, 2
          %s260 = ssub.s32 0, %s259
          %s261 = smul.u32 %s32, %s260
          %s262 = sadd.s32 %s33, %s261
          %s263 = smul.u32 8, %s262
          %p264 = scmp.lt.s32.totalorder %s263, 7
          %s265 = scalar_select %p264, %s263, 7
          %s266 = smul.addr %s265, 4
          %s267 = scalar_lea.vmem %s0, %s266
          %s268 = smul.u32 %s33, 2
          %s269 = ssub.s32 0, %s268
          %s270 = smul.u32 %s32, %s269
          %s271 = sadd.s32 %s33, %s270
          %s272 = smul.u32 8, %s271
        $region20: #{tpu_custom_call.1} parent=15 // pred_fallthru
          _
        // Predicated region
        $region21: #{tpu_custom_call.1} parent=15 // pred_check
          %p273 = pneg %p91
        $region22: #{tpu_custom_call.1} parent=15 // pred_check_branch
          %275 = sbr.rel (%p273) target = $region24
        $region23: #{tpu_custom_call.1} parent=15 // pred_region
          %s276 = sand.u32 %s81, 1
          %s277 = scalar_lea.sflag [#allocation5], %s276
          %s278 = sand.u32 %s81, 1
          %s279 = smul.addr %s278, 48
          %s280 = scalar_lea.vmem [#allocation4], %s279
          %s282 = ssub.s32 768, 768
          %283 = vsyncadd %s277, %s282
          %s284 = smul.addr %s32, 12
          %s285 = smul.addr %s284, 64
          %s286 = scalar_lea.hbm %s1, %s285
          %s287 = sshll.u32 %s280, 4
          %s288 = int_to_ptr.vmem [resolvable:$true] %s287
          %293 = dma.hbm_to_vmem [thread:$0]  %s286, 768, %s288, %s277, 192, 192, 12
        $region24: #{tpu_custom_call.1} parent=15 // pred_fallthru
          _
        // Predicated region
        $region25: #{tpu_custom_call.1} parent=15 // pred_check
          %p294 = pneg %p117
        $region26: #{tpu_custom_call.1} parent=15 // pred_check_branch
          %296 = sbr.rel (%p294) target = $region28
        $region27: #{tpu_custom_call.1} parent=15 // pred_region
          %s297 = sand.u32 %s107, 1
          %s298 = scalar_lea.sflag [#allocation8], %s297
          %s299 = sand.u32 %s107, 1
          %s300 = smul.addr %s299, 192
          %s301 = scalar_lea.vmem [#allocation7], %s300
          %s303 = ssub.s32 3072, 3072
          %304 = vsyncadd %s298, %s303
          %s305 = smul.addr %s32, 48
          %s306 = smul.addr %s305, 64
          %s307 = scalar_lea.hbm %s2, %s306
          %s308 = sshll.u32 %s301, 4
          %s309 = int_to_ptr.vmem [resolvable:$true] %s308
          %314 = dma.hbm_to_vmem [thread:$0]  %s307, 3072, %s309, %s298, 192, 192, 12
        $region28: #{tpu_custom_call.1} parent=15 // pred_fallthru
          _
        // Predicated region
        $region29: #{tpu_custom_call.1} parent=15 // pred_check
          %p315 = pneg %p143
        $region30: #{tpu_custom_call.1} parent=15 // pred_check_branch
          %317 = sbr.rel (%p315) target = $region32
        $region31: #{tpu_custom_call.1} parent=15 // pred_region
          %p318 = scmp.lt.s32.totalorder %s32, 1
          %s319 = scalar_select %p318, %s32, 1
          %s320 = smul.addr %s319, 3
          %s321 = scalar_lea.vmem %s3, %s320
        $region32: #{tpu_custom_call.1} parent=15 // pred_fallthru
          _
        // Predicated region
        $region33: #{tpu_custom_call.1} parent=15 // pred_check
          %p322 = pneg %p169
        $region34: #{tpu_custom_call.1} parent=15 // pred_check_branch
          %324 = sbr.rel (%p322) target = $region36
        $region35: #{tpu_custom_call.1} parent=15 // pred_region
          %p325 = scmp.lt.s32.totalorder %s32, 1
          %s326 = scalar_select %p325, %s32, 1
          %s327 = scalar_lea.vmem %s4, %s326
        $region36: #{tpu_custom_call.1} parent=15 // pred_fallthru
          _
      $region16: #{tpu_custom_call.1} parent=5 // pred_fallthru
        _
      %p328 = scmp.le.s32.totalorder 1, %s25
      %p329 = scmp.lt.s32.totalorder %s25, 3
      %p330 = pnand %p328, %p329
      %p331 = pneg %p330
      // Predicated region
      $region37: #{tpu_custom_call.1} parent=5 // pred_check
        _
      $region38: #{tpu_custom_call.1} parent=5 // pred_check_branch
        %333 = sbr.rel (%p330) target = $region40
      $region39: #{tpu_custom_call.1} parent=5 // pred_region
        %s334 = ssub.s32 %s25, 1
        %s335 = sand.u32 %s84, 1
        %s336 = scalar_lea.sflag [#allocation5], %s335
        %s337 = sand.u32 %s84, 1
        %s338 = smul.addr %s337, 48
        %s339 = scalar_lea.vmem [#allocation4], %s338
        // Predicated region
        $region41: #{tpu_custom_call.1} parent=39 // pred_check
          %p340 = pneg %p97
        $region42: #{tpu_custom_call.1} parent=39 // pred_check_branch
          %342 = sbr.rel (%p340) target = $region44
        $region43: #{tpu_custom_call.1} parent=39 // pred_region
          %343 = dma.done %s336, 768
        $region44: #{tpu_custom_call.1} parent=39 // pred_fallthru
          _
        %s344 = sand.u32 %s110, 1
        %s345 = scalar_lea.sflag [#allocation8], %s344
        %s346 = sand.u32 %s110, 1
        %s347 = smul.addr %s346, 192
        %s348 = scalar_lea.vmem [#allocation7], %s347
        // Predicated region
        $region45: #{tpu_custom_call.1} parent=39 // pred_check
          %p349 = pneg %p123
        $region46: #{tpu_custom_call.1} parent=39 // pred_check_branch
          %351 = sbr.rel (%p349) target = $region48
        $region47: #{tpu_custom_call.1} parent=39 // pred_region
          %352 = dma.done %s345, 3072
        $region48: #{tpu_custom_call.1} parent=39 // pred_fallthru
          _
        %s353 = smul.u32 %s35, 2
        %s354 = ssub.s32 0, %s353
        %s355 = smul.u32 %s34, %s354
        %s356 = sadd.s32 %s35, %s355
        %s357 = smul.u32 8, %s356
        %p358 = scmp.lt.s32.totalorder %s357, 7
        %s359 = scalar_select %p358, %s357, 7
        %s360 = smul.addr %s359, 4
        %s361 = scalar_lea.vmem %s0, %s360
        %p362 = pneg %p71
        %p363 = pneg %p68
        %s364 = sand.u32 %s84, 1
        %s365 = scalar_lea.sflag [#allocation5], %s364
        %s366 = sand.u32 %s84, 1
        %s367 = smul.addr %s366, 48
        %s368 = scalar_lea.vmem [#allocation4], %s367
        %p369 = pneg %p97
        %p370 = pneg %p94
        %s371 = sand.u32 %s110, 1
        %s372 = scalar_lea.sflag [#allocation8], %s371
        %s373 = sand.u32 %s110, 1
        %s374 = smul.addr %s373, 192
        %s375 = scalar_lea.vmem [#allocation7], %s374
        %p376 = pneg %p123
        %p377 = pneg %p120
        %p378 = scmp.lt.s32.totalorder %s34, 1
        %s379 = scalar_select %p378, %s34, 1
        %s380 = smul.addr %s379, 3
        %s381 = scalar_lea.vmem %s3, %s380
        %p382 = pneg %p149
        %p383 = pneg %p146
        %p384 = scmp.lt.s32.totalorder %s34, 1
        %s385 = scalar_select %p384, %s34, 1
        %s386 = scalar_lea.vmem %s4, %s385
        %p387 = pneg %p175
        %p388 = pneg %p172
        %p389 = pneg %p211
        %p390 = pneg %p208
        %s391 = sand.u32 %s198, 1
        %s392 = scalar_lea.sflag [#allocation6], %s391
        %s393 = sand.u32 %s198, 1
        %s394 = smul.addr %s393, 32
        %s395 = scalar_lea.vmem [#allocation9], %s394
        %p396 = pneg %p237
        %p397 = pneg %p234
        %s398 = sand.u32 %s224, 1
        %s399 = scalar_lea.sflag [#allocation11], %s398
        %s400 = sand.u32 %s224, 1
        %s401 = smul.addr %s400, 8
        %s402 = scalar_lea.vmem [#allocation10], %s401
        %s403 = smul.u32 %s35, 2
        %s404 = ssub.s32 0, %s403
        %s405 = smul.u32 %s34, %s404
        %s406 = sadd.s32 %s35, %s405
        %s407 = smul.u32 8, %s406
        %p408 = scmp.lt.s32.totalorder %s407, 7
        %s409 = scalar_select %p408, %s407, 7
        %s410 = smul.addr %s409, 4
        %s411 = scalar_lea.vmem %s0, %s410
        %s412 = smul.u32 %s35, 2
        %s413 = ssub.s32 0, %s412
        %s414 = smul.u32 %s34, %s413
        %s415 = sadd.s32 %s35, %s414
        %s416 = smul.u32 8, %s415
        %p417 = scmp.lt.s32.totalorder %s34, 1
        %s418 = scalar_select %p417, %s34, 1
        %s419 = smul.addr %s418, 3
        %s420 = scalar_lea.vmem %s3, %s419
        %p421 = scmp.lt.s32.totalorder %s34, 1
        %s422 = scalar_select %p421, %s34, 1
        %s423 = scalar_lea.vmem %s4, %s422
        %s424 = smul.u32 %s35, 2
        %s425 = ssub.s32 0, %s424
        %s426 = smul.u32 %s34, %s425
        %s427 = sadd.s32 %s35, %s426
        %s428 = smul.u32 8, %s427
        %p430 = scmp.eq.s32.totalorder %s35, 0
        // Predicated region
        $region49: #{tpu_custom_call.1} parent=39 // pred_check
          %p431 = pneg %p430
        $region50: #{tpu_custom_call.1} parent=39 // pred_check_branch
          %433 = sbr.rel (%p431) target = $region52
        $region51: #{tpu_custom_call.1} parent=39 // pred_region
          %434 = vst [vmem:[#allocation2] sm:$0xff] 0.0
        $region52: #{tpu_custom_call.1} parent=39 // pred_fallthru
          _
        %v435 = vld [vmem:[%s411] sm:$0xf]
        %v436 = vld [vmem:[%s411 + $0x4] sm:$0xf]
        %v437 = vld [vmem:[%s411 + $0x8] sm:$0xf]
        %v438 = vld [vmem:[%s411 + $0xc] sm:$0xf]
        %v439 = vld [vmem:[%s411 + $0x10] sm:$0xf]
        %v440 = vld [vmem:[%s411 + $0x14] sm:$0xf]
        %v441 = vld [vmem:[%s411 + $0x18] sm:$0xf]
        %v442 = vld [vmem:[%s411 + $0x1c] sm:$0xf]
        %v443 = vld [vmem:[%s339] sm:$0xff]
        %v444 = vld [vmem:[%s339 + $0x8] sm:$0xf]
        %v445 = vld [vmem:[%s339 + $0xc] sm:$0xff]
        %v446 = vld [vmem:[%s339 + $0x14] sm:$0xf]
        %v447 = vld [vmem:[%s339 + $0x18] sm:$0xff]
        %v448 = vld [vmem:[%s339 + $0x20] sm:$0xf]
        %v449 = vld [vmem:[%s339 + $0x24] sm:$0xff]
        %v450 = vld [vmem:[%s339 + $0x2c] sm:$0xf]
        %v451 = vld [vmem:[%s420] sm:$0x7]
        %v453 = vlaneseq
        %v454 = vshrl.u32 %v453, 7
        %v455 = vsub.s32 0, %v454
        %v456 = vrot.slane %v451, %v455
        %v457 = vlaneseq
        %v458 = vshrl.u32 %v457, 7
        %v459 = vsub.s32 1, %v458
        %v460 = vrot.slane %v451, %v459
        %v461 = vlaneseq
        %v462 = vshrl.u32 %v461, 7
        %v463 = vsub.s32 2, %v462
        %v464 = vrot.slane %v451, %v463
        %v476 = vunpack.c.l.b16 %v435
        %v477 = vunpack.c.l.b16 %v436
        %v478 = vunpack.c.l.b16 %v437
        %v479 = vunpack.c.l.b16 %v438
        %v480 = vunpack.c.l.b16 %v439
        %v481 = vunpack.c.l.b16 %v440
        %v482 = vunpack.c.l.b16 %v441
        %v483 = vunpack.c.l.b16 %v442
        %v484 = vpack.c.b16 %v477, %v476
        %v485 = vpack.c.b16 %v479, %v478
        %v486 = vpack.c.b16 %v481, %v480
        %v487 = vpack.c.b16 %v483, %v482
        %v496 = vunpack.c.l.b16 %v443
        %v497 = vunpack.c.h.b16 %v443
        %v498 = vunpack.c.l.b16 %v444
        %v499 = vunpack.c.l.b16 %v445
        %v500 = vunpack.c.h.b16 %v445
        %v501 = vunpack.c.l.b16 %v446
        %v502 = vunpack.c.l.b16 %v447
        %v503 = vunpack.c.h.b16 %v447
        %v504 = vunpack.c.l.b16 %v448
        %v505 = vunpack.c.l.b16 %v449
        %v506 = vunpack.c.h.b16 %v449
        %v507 = vunpack.c.l.b16 %v450
        %v508 = vpack.c.b16 %v499, %v496
        %v509 = vpack.c.b16 %v500, %v497
        %v510 = vpack.c.b16 %v501, %v498
        %v511 = vpack.c.b16 %v505, %v502
        %v512 = vpack.c.b16 %v506, %v503
        %v513 = vpack.c.b16 %v507, %v504
        %vm520 = vcmask 261120
        %v522 = vsel %vm520, %v484, 0
        %v525 = vsel %vm520, %v485, 0
        %v528 = vsel %vm520, %v486, 0
        %v531 = vsel %vm520, %v487, 0
        %533 = vmatprep.subr.bf16.mxu0 %v509
        %534 = vmatpush1.bf16.msra.mxu0 %v508
        %535 = vmatprep.subr.bf16.mxu0 %v512
        %536 = vmatpush1.bf16.msra.mxu0 %v511
        %537 = vmatprep.subr.bf16.mxu0 0
        %538 = vmatpush1.bf16.msra.mxu0 0
        %539 = vmatprep.subr.bf16.mxu0 0
        %540 = vmatpush1.bf16.msra.mxu0 0
        %541 = vmatprep.subr.bf16.mxu0 0
        %542 = vmatpush1.bf16.msra.mxu0 0
        %543 = vmatprep.subr.bf16.mxu0 0
        %544 = vmatpush1.bf16.msra.mxu0 0
        %545 = vmatprep.subr.bf16.mxu0 0
        %546 = vmatpush1.bf16.msra.mxu0 0
        %547 = vmatprep.subr.bf16.mxu0 0
        %548 = vmatpush1.bf16.msra.mxu0 0
        %549 = vmatprep.subr.bf16.mxu0 0
        %550 = vmatpush1.bf16.msra.mxu0 0
        %551 = vmatprep.subr.bf16.mxu0 0
        %552 = vmatpush1.bf16.msra.mxu0 0
        %553 = vmatprep.subr.bf16.mxu0 0
        %554 = vmatpush1.bf16.msra.mxu0 0
        %555 = vmatprep.subr.bf16.mxu0 0
        %556 = vmatpush1.bf16.msra.mxu0 0
        %557 = vmatprep.subr.bf16.mxu0 0
        %558 = vmatpush1.bf16.msra.mxu0 0
        %559 = vmatprep.subr.bf16.mxu0 0
        %560 = vmatpush1.bf16.msra.mxu0 0
        %561 = vmatprep.subr.bf16.mxu0 0
        %562 = vmatpush1.bf16.msra.mxu0 0
        %563 = vmatprep.subr.bf16.mxu0 0
        %564 = vmatpush1.bf16.msra.mxu0 0
        %565 = vmatprep.mubr.bf16.mxu0 0
        %566 = vmatmul.mubr.bf16.gmra.mrb[0].mxu0 %v522
        %v567 = vpop.f32.mrb[0].mxu0
        %v568 = vadd.f32 %v456, %v567
        %v569 = vpop.f32.mrb[0].mxu0
        %v570 = vadd.f32 %v460, %v569
        %v571 = vpop.f32.mrb[0].mxu0
        %v572 = vadd.f32 %v456, %v571
        %v573 = vpop.f32.mrb[0].mxu0
        %v574 = vadd.f32 %v460, %v573
        %575 = vmatprep.mubr.bf16.mxu0 0
        %576 = vmatmul.mubr.bf16.gmra.mrb[0].mxu0 %v525
        %v577 = vpop.f32.mrb[0].mxu0
        %v578 = vadd.f32 %v456, %v577
        %v579 = vpop.f32.mrb[0].mxu0
        %v580 = vadd.f32 %v460, %v579
        %v581 = vpop.f32.mrb[0].mxu0
        %v582 = vadd.f32 %v456, %v581
        %v583 = vpop.f32.mrb[0].mxu0
        %v584 = vadd.f32 %v460, %v583
        %585 = vmatprep.mubr.bf16.mxu0 0
        %586 = vmatmul.mubr.bf16.gmra.mrb[0].mxu0 %v528
        %v587 = vpop.f32.mrb[0].mxu0
        %v588 = vadd.f32 %v456, %v587
        %v589 = vpop.f32.mrb[0].mxu0
        %v590 = vadd.f32 %v460, %v589
        %v591 = vpop.f32.mrb[0].mxu0
        %v592 = vadd.f32 %v456, %v591
        %v593 = vpop.f32.mrb[0].mxu0
        %v594 = vadd.f32 %v460, %v593
        %595 = vmatprep.mubr.bf16.mxu0 0
        %596 = vmatmul.mubr.bf16.gmra.mrb[0].mxu0 %v531
        %v597 = vpop.f32.mrb[0].mxu0
        %v598 = vadd.f32 %v456, %v597
        %v599 = vpop.f32.mrb[0].mxu0
        %v600 = vadd.f32 %v460, %v599
        %v601 = vpop.f32.mrb[0].mxu0
        %v602 = vadd.f32 %v456, %v601
        %v603 = vpop.f32.mrb[0].mxu0
        %v604 = vadd.f32 %v460, %v603
        %605 = vdwg.mxu0
        %606 = vmatprep.subr.bf16.mxu0 0
        %607 = vmatpush1.bf16.msra.mxu0 %v510
        %608 = vmatprep.subr.bf16.mxu0 0
        %609 = vmatpush1.bf16.msra.mxu0 %v513
        %610 = vmatprep.subr.bf16.mxu0 0
        %611 = vmatpush1.bf16.msra.mxu0 0
        %612 = vmatprep.subr.bf16.mxu0 0
        %613 = vmatpush1.bf16.msra.mxu0 0
        %614 = vmatprep.subr.bf16.mxu0 0
        %615 = vmatpush1.bf16.msra.mxu0 0
        %616 = vmatprep.subr.bf16.mxu0 0
        %617 = vmatpush1.bf16.msra.mxu0 0
        %618 = vmatprep.subr.bf16.mxu0 0
        %619 = vmatpush1.bf16.msra.mxu0 0
        %620 = vmatprep.subr.bf16.mxu0 0
        %621 = vmatpush1.bf16.msra.mxu0 0
        %622 = vmatprep.subr.bf16.mxu0 0
        %623 = vmatpush1.bf16.msra.mxu0 0
        %624 = vmatprep.subr.bf16.mxu0 0
        %625 = vmatpush1.bf16.msra.mxu0 0
        %626 = vmatprep.subr.bf16.mxu0 0
        %627 = vmatpush1.bf16.msra.mxu0 0
        %628 = vmatprep.subr.bf16.mxu0 0
        %629 = vmatpush1.bf16.msra.mxu0 0
        %630 = vmatprep.subr.bf16.mxu0 0
        %631 = vmatpush1.bf16.msra.mxu0 0
        %632 = vmatprep.subr.bf16.mxu0 0
        %633 = vmatpush1.bf16.msra.mxu0 0
        %634 = vmatprep.subr.bf16.mxu0 0
        %635 = vmatpush1.bf16.msra.mxu0 0
        %636 = vmatprep.subr.bf16.mxu0 0
        %637 = vmatpush1.bf16.msra.mxu0 0
        %638 = vmatprep.mubr.bf16.mxu0 0
        %639 = vmatmul.mubr.bf16.gmra.mrb[0].mxu0 %v522
        %v640 = vpop.f32.mrb[0].mxu0
        %v641 = vadd.f32 %v464, %v640
        %v642 = vpop.f32.mrb[0].mxu0
        %v643 = vpop.f32.mrb[0].mxu0
        %v644 = vadd.f32 %v464, %v643
        %v645 = vpop.f32.mrb[0].mxu0
        %646 = vmatprep.mubr.bf16.mxu0 0
        %647 = vmatmul.mubr.bf16.gmra.mrb[0].mxu0 %v525
        %v648 = vpop.f32.mrb[0].mxu0
        %v649 = vadd.f32 %v464, %v648
        %v650 = vpop.f32.mrb[0].mxu0
        %v651 = vpop.f32.mrb[0].mxu0
        %v652 = vadd.f32 %v464, %v651
        %v653 = vpop.f32.mrb[0].mxu0
        %654 = vmatprep.mubr.bf16.mxu0 0
        %655 = vmatmul.mubr.bf16.gmra.mrb[0].mxu0 %v528
        %v656 = vpop.f32.mrb[0].mxu0
        %v657 = vadd.f32 %v464, %v656
        %v658 = vpop.f32.mrb[0].mxu0
        %v659 = vpop.f32.mrb[0].mxu0
        %v660 = vadd.f32 %v464, %v659
        %v661 = vpop.f32.mrb[0].mxu0
        %662 = vmatprep.mubr.bf16.mxu0 0
        %663 = vmatmul.mubr.bf16.gmra.mrb[0].mxu0 %v531
        %v664 = vpop.f32.mrb[0].mxu0
        %v665 = vadd.f32 %v464, %v664
        %v666 = vpop.f32.mrb[0].mxu0
        %v667 = vpop.f32.mrb[0].mxu0
        %v668 = vadd.f32 %v464, %v667
        %v669 = vpop.f32.mrb[0].mxu0
        %670 = vdwg.mxu0
        %v671 = vpack.c.bf16 %v568, %v568
        %v672 = vpack.c.bf16 %v570, %v570
        %v673 = vpack.c.bf16 %v641, %v641
        %v674 = vpack.c.bf16 %v572, %v572
        %v675 = vpack.c.bf16 %v574, %v574
        %v676 = vpack.c.bf16 %v644, %v644
        %v677 = vpack.c.bf16 %v578, %v578
        %v678 = vpack.c.bf16 %v580, %v580
        %v679 = vpack.c.bf16 %v649, %v649
        %v680 = vpack.c.bf16 %v582, %v582
        %v681 = vpack.c.bf16 %v584, %v584
        %v682 = vpack.c.bf16 %v652, %v652
        %v683 = vpack.c.bf16 %v588, %v588
        %v684 = vpack.c.bf16 %v590, %v590
        %v685 = vpack.c.bf16 %v657, %v657
        %v686 = vpack.c.bf16 %v592, %v592
        %v687 = vpack.c.bf16 %v594, %v594
        %v688 = vpack.c.bf16 %v660, %v660
        %v689 = vpack.c.bf16 %v598, %v598
        %v690 = vpack.c.bf16 %v600, %v600
        %v691 = vpack.c.bf16 %v665, %v665
        %v692 = vpack.c.bf16 %v602, %v602
        %v693 = vpack.c.bf16 %v604, %v604
        %v694 = vpack.c.bf16 %v668, %v668
        %v719 = vunpack.c.l.b16 %v671
        %v720 = vunpack.c.l.b16 %v672
        %v721 = vunpack.c.l.b16 %v673
        %v722 = vunpack.c.l.b16 %v674
        %v723 = vunpack.c.l.b16 %v675
        %v724 = vunpack.c.l.b16 %v676
        %v725 = vunpack.c.l.b16 %v677
        %v726 = vunpack.c.l.b16 %v678
        %v727 = vunpack.c.l.b16 %v679
        %v728 = vunpack.c.l.b16 %v680
        %v729 = vunpack.c.l.b16 %v681
        %v730 = vunpack.c.l.b16 %v682
        %v731 = vunpack.c.l.b16 %v683
        %v732 = vunpack.c.l.b16 %v684
        %v733 = vunpack.c.l.b16 %v685
        %v734 = vunpack.c.l.b16 %v686
        %v735 = vunpack.c.l.b16 %v687
        %v736 = vunpack.c.l.b16 %v688
        %v737 = vunpack.c.l.b16 %v689
        %v738 = vunpack.c.l.b16 %v690
        %v739 = vunpack.c.l.b16 %v691
        %v740 = vunpack.c.l.b16 %v692
        %v741 = vunpack.c.l.b16 %v693
        %v742 = vunpack.c.l.b16 %v694
        %v743 = vpack.c.b16 %v720, %v719
        %v744 = vpack.c.b16 %v721, %v721
        %v745 = vpack.c.b16 %v723, %v722
        %v746 = vpack.c.b16 %v724, %v724
        %v747 = vpack.c.b16 %v726, %v725
        %v748 = vpack.c.b16 %v727, %v727
        %v749 = vpack.c.b16 %v729, %v728
        %v750 = vpack.c.b16 %v730, %v730
        %v751 = vpack.c.b16 %v732, %v731
        %v752 = vpack.c.b16 %v733, %v733
        %v753 = vpack.c.b16 %v735, %v734
        %v754 = vpack.c.b16 %v736, %v736
        %v755 = vpack.c.b16 %v738, %v737
        %v756 = vpack.c.b16 %v739, %v739
        %v757 = vpack.c.b16 %v741, %v740
        %v758 = vpack.c.b16 %v742, %v742
        %775 = vst [vmem:[#allocation3] sm:$0xff] %v743
        %776 = vst [vmem:[#allocation3 + $0x8] sm:$0xf] %v744
        %777 = vst [vmem:[#allocation3 + $0xc] sm:$0xff] %v745
        %778 = vst [vmem:[#allocation3 + $0x14] sm:$0xf] %v746
        %779 = vst [vmem:[#allocation3 + $0x18] sm:$0xff] %v747
        %780 = vst [vmem:[#allocation3 + $0x20] sm:$0xf] %v748
        %781 = vst [vmem:[#allocation3 + $0x24] sm:$0xff] %v749
        %782 = vst [vmem:[#allocation3 + $0x2c] sm:$0xf] %v750
        %783 = vst [vmem:[#allocation3 + $0x30] sm:$0xff] %v751
        %784 = vst [vmem:[#allocation3 + $0x38] sm:$0xf] %v752
        %785 = vst [vmem:[#allocation3 + $0x3c] sm:$0xff] %v753
        %786 = vst [vmem:[#allocation3 + $0x44] sm:$0xf] %v754
        %787 = vst [vmem:[#allocation3 + $0x48] sm:$0xff] %v755
        %788 = vst [vmem:[#allocation3 + $0x50] sm:$0xf] %v756
        %789 = vst [vmem:[#allocation3 + $0x54] sm:$0xff] %v757
        %790 = vst [vmem:[#allocation3 + $0x5c] sm:$0xf] %v758
        %v791 = vld [vmem:[%s348] sm:$0xff]
        %v792 = vld [vmem:[%s348 + $0x8] sm:$0xf]
        %v793 = vld [vmem:[%s348 + $0xc] sm:$0xff]
        %v794 = vld [vmem:[%s348 + $0x14] sm:$0xf]
        %v795 = vld [vmem:[%s348 + $0x18] sm:$0xff]
        %v796 = vld [vmem:[%s348 + $0x20] sm:$0xf]
        %v797 = vld [vmem:[%s348 + $0x24] sm:$0xff]
        %v798 = vld [vmem:[%s348 + $0x2c] sm:$0xf]
        %v799 = vld [vmem:[%s348 + $0x30] sm:$0xff]
        %v800 = vld [vmem:[%s348 + $0x38] sm:$0xf]
        %v801 = vld [vmem:[%s348 + $0x3c] sm:$0xff]
        %v802 = vld [vmem:[%s348 + $0x44] sm:$0xf]
        %v803 = vld [vmem:[%s348 + $0x48] sm:$0xff]
        %v804 = vld [vmem:[%s348 + $0x50] sm:$0xf]
        %v805 = vld [vmem:[%s348 + $0x54] sm:$0xff]
        %v806 = vld [vmem:[%s348 + $0x5c] sm:$0xf]
        %v807 = vld [vmem:[%s348 + $0x60] sm:$0xff]
        %v808 = vld [vmem:[%s348 + $0x68] sm:$0xf]
        %v809 = vld [vmem:[%s348 + $0x6c] sm:$0xff]
        %v810 = vld [vmem:[%s348 + $0x74] sm:$0xf]
        %v811 = vld [vmem:[%s348 + $0x78] sm:$0xff]
        %v812 = vld [vmem:[%s348 + $0x80] sm:$0xf]
        %v813 = vld [vmem:[%s348 + $0x84] sm:$0xff]
        %v814 = vld [vmem:[%s348 + $0x8c] sm:$0xf]
        %v815 = vld [vmem:[%s348 + $0x90] sm:$0xff]
        %v816 = vld [vmem:[%s348 + $0x98] sm:$0xf]
        %v817 = vld [vmem:[%s348 + $0x9c] sm:$0xff]
        %v818 = vld [vmem:[%s348 + $0xa4] sm:$0xf]
        %v819 = vld [vmem:[%s348 + $0xa8] sm:$0xff]
        %v820 = vld [vmem:[%s348 + $0xb0] sm:$0xf]
        %v821 = vld [vmem:[%s348 + $0xb4] sm:$0xff]
        %v822 = vld [vmem:[%s348 + $0xbc] sm:$0xf]
        %v823 = vld [vmem:[%s423] sm:$0x1]
        %v824 = vld [vmem:[#allocation2] sm:$0xff]
        %s825 = smul.u32 %s34, 7
        %v826 = vpack.c.bf16 %v824, %v824
        %v859 = vunpack.c.l.b16 %v791
        %v860 = vunpack.c.h.b16 %v791
        %v861 = vunpack.c.l.b16 %v792
        %v862 = vunpack.c.l.b16 %v793
        %v863 = vunpack.c.h.b16 %v793
        %v864 = vunpack.c.l.b16 %v794
        %v865 = vunpack.c.l.b16 %v795
        %v866 = vunpack.c.h.b16 %v795
        %v867 = vunpack.c.l.b16 %v796
        %v868 = vunpack.c.l.b16 %v797
        %v869 = vunpack.c.h.b16 %v797
        %v870 = vunpack.c.l.b16 %v798
        %v871 = vunpack.c.l.b16 %v799
        %v872 = vunpack.c.h.b16 %v799
        %v873 = vunpack.c.l.b16 %v800
        %v874 = vunpack.c.l.b16 %v801
        %v875 = vunpack.c.h.b16 %v801
        %v876 = vunpack.c.l.b16 %v802
        %v877 = vunpack.c.l.b16 %v803
        %v878 = vunpack.c.h.b16 %v803
        %v879 = vunpack.c.l.b16 %v804
        %v880 = vunpack.c.l.b16 %v805
        %v881 = vunpack.c.h.b16 %v805
        %v882 = vunpack.c.l.b16 %v806
        %v883 = vunpack.c.l.b16 %v807
        %v884 = vunpack.c.h.b16 %v807
        %v885 = vunpack.c.l.b16 %v808
        %v886 = vunpack.c.l.b16 %v809
        %v887 = vunpack.c.h.b16 %v809
        %v888 = vunpack.c.l.b16 %v810
        %v889 = vunpack.c.l.b16 %v811
        %v890 = vunpack.c.h.b16 %v811
        %v891 = vunpack.c.l.b16 %v812
        %v892 = vunpack.c.l.b16 %v813
        %v893 = vunpack.c.h.b16 %v813
        %v894 = vunpack.c.l.b16 %v814
        %v895 = vunpack.c.l.b16 %v815
        %v896 = vunpack.c.h.b16 %v815
        %v897 = vunpack.c.l.b16 %v816
        %v898 = vunpack.c.l.b16 %v817
        %v899 = vunpack.c.h.b16 %v817
        %v900 = vunpack.c.l.b16 %v818
        %v901 = vunpack.c.l.b16 %v819
        %v902 = vunpack.c.h.b16 %v819
        %v903 = vunpack.c.l.b16 %v820
        %v904 = vunpack.c.l.b16 %v821
        %v905 = vunpack.c.h.b16 %v821
        %v906 = vunpack.c.l.b16 %v822
        %v907 = vpack.c.b16 %v862, %v859
        %v908 = vpack.c.b16 %v863, %v860
        %v909 = vpack.c.b16 %v864, %v861
        %v910 = vpack.c.b16 %v868, %v865
        %v911 = vpack.c.b16 %v869, %v866
        %v912 = vpack.c.b16 %v870, %v867
        %v913 = vpack.c.b16 %v874, %v871
        %v914 = vpack.c.b16 %v875, %v872
        %v915 = vpack.c.b16 %v876, %v873
        %v916 = vpack.c.b16 %v880, %v877
        %v917 = vpack.c.b16 %v881, %v878
        %v918 = vpack.c.b16 %v882, %v879
        %v919 = vpack.c.b16 %v886, %v883
        %v920 = vpack.c.b16 %v887, %v884
        %v921 = vpack.c.b16 %v888, %v885
        %v922 = vpack.c.b16 %v892, %v889
        %v923 = vpack.c.b16 %v893, %v890
        %v924 = vpack.c.b16 %v894, %v891
        %v925 = vpack.c.b16 %v898, %v895
        %v926 = vpack.c.b16 %v899, %v896
        %v927 = vpack.c.b16 %v900, %v897
        %v928 = vpack.c.b16 %v904, %v901
        %v929 = vpack.c.b16 %v905, %v902
        %v930 = vpack.c.b16 %v906, %v903
        %955 = vmatprep.subr.bf16.mxu0 %v908
        %956 = vmatpush1.bf16.msra.mxu0 %v907
        %957 = vmatprep.subr.bf16.mxu0 %v911
        %958 = vmatpush1.bf16.msra.mxu0 %v910
        %959 = vmatprep.subr.bf16.mxu0 %v914
        %960 = vmatpush1.bf16.msra.mxu0 %v913
        %961 = vmatprep.subr.bf16.mxu0 %v917
        %962 = vmatpush1.bf16.msra.mxu0 %v916
        %963 = vmatprep.subr.bf16.mxu0 %v920
        %964 = vmatpush1.bf16.msra.mxu0 %v919
        %965 = vmatprep.subr.bf16.mxu0 %v923
        %966 = vmatpush1.bf16.msra.mxu0 %v922
        %967 = vmatprep.subr.bf16.mxu0 %v926
        %968 = vmatpush1.bf16.msra.mxu0 %v925
        %969 = vmatprep.subr.bf16.mxu0 %v929
        %970 = vmatpush1.bf16.msra.mxu0 %v928
        %971 = vmatprep.subr.bf16.mxu0 0
        %972 = vmatpush1.bf16.msra.mxu0 0
        %973 = vmatprep.subr.bf16.mxu0 0
        %974 = vmatpush1.bf16.msra.mxu0 0
        %975 = vmatprep.subr.bf16.mxu0 0
        %976 = vmatpush1.bf16.msra.mxu0 0
        %977 = vmatprep.subr.bf16.mxu0 0
        %978 = vmatpush1.bf16.msra.mxu0 0
        %979 = vmatprep.subr.bf16.mxu0 0
        %980 = vmatpush1.bf16.msra.mxu0 0
        %981 = vmatprep.subr.bf16.mxu0 0
        %982 = vmatpush1.bf16.msra.mxu0 0
        %983 = vmatprep.subr.bf16.mxu0 0
        %984 = vmatpush1.bf16.msra.mxu0 0
        %985 = vmatprep.subr.bf16.mxu0 0
        %986 = vmatpush1.bf16.msra.mxu0 0
        %987 = vmatprep.mubr.bf16.mxu0 0
        %988 = vmatmul.mubr.bf16.gmra.mrb[0].mxu0 %v826
        %v989 = vpop.f32.mrb[0].mxu0
        %v990 = vadd.f32 0.0, %v989
        %v991 = vpop.f32.mrb[0].mxu0
        %v992 = vadd.f32 0.0, %v991
        %v993 = vpop.f32.mrb[0].mxu0
        %v994 = vpop.f32.mrb[0].mxu0
        %995 = vdwg.mxu0
        %996 = vmatprep.subr.bf16.mxu0 0
        %997 = vmatpush1.bf16.msra.mxu0 %v909
        %998 = vmatprep.subr.bf16.mxu0 0
        %999 = vmatpush1.bf16.msra.mxu0 %v912
        %1000 = vmatprep.subr.bf16.mxu0 0
        %1001 = vmatpush1.bf16.msra.mxu0 %v915
        %1002 = vmatprep.subr.bf16.mxu0 0
        %1003 = vmatpush1.bf16.msra.mxu0 %v918
        %1004 = vmatprep.subr.bf16.mxu0 0
        %1005 = vmatpush1.bf16.msra.mxu0 %v921
        %1006 = vmatprep.subr.bf16.mxu0 0
        %1007 = vmatpush1.bf16.msra.mxu0 %v924
        %1008 = vmatprep.subr.bf16.mxu0 0
        %1009 = vmatpush1.bf16.msra.mxu0 %v927
        %1010 = vmatprep.subr.bf16.mxu0 0
        %1011 = vmatpush1.bf16.msra.mxu0 %v930
        %1012 = vmatprep.subr.bf16.mxu0 0
        %1013 = vmatpush1.bf16.msra.mxu0 0
        %1014 = vmatprep.subr.bf16.mxu0 0
        %1015 = vmatpush1.bf16.msra.mxu0 0
        %1016 = vmatprep.subr.bf16.mxu0 0
        %1017 = vmatpush1.bf16.msra.mxu0 0
        %1018 = vmatprep.subr.bf16.mxu0 0
        %1019 = vmatpush1.bf16.msra.mxu0 0
        %1020 = vmatprep.subr.bf16.mxu0 0
        %1021 = vmatpush1.bf16.msra.mxu0 0
        %1022 = vmatprep.subr.bf16.mxu0 0
        %1023 = vmatpush1.bf16.msra.mxu0 0
        %1024 = vmatprep.subr.bf16.mxu0 0
        %1025 = vmatpush1.bf16.msra.mxu0 0
        %1026 = vmatprep.subr.bf16.mxu0 0
        %1027 = vmatpush1.bf16.msra.mxu0 0
        %1028 = vmatprep.mubr.bf16.mxu0 0
        %1029 = vmatmul.mubr.bf16.gmra.mrb[0].mxu0 %v826
        %v1030 = vpop.f32.mrb[0].mxu0
        %v1031 = vadd.f32 0.0, %v1030
        %v1032 = vpop.f32.mrb[0].mxu0
        %v1033 = vpop.f32.mrb[0].mxu0
        %v1034 = vpop.f32.mrb[0].mxu0
        %1035 = vdwg.mxu0
        %s1036 = smul.u32 %s825, 3
        %s1037 = smul.addr %s1036, 4
        %s1038 = scalar_lea.vmem [#allocation3], %s1037
        %v1039 = vld [vmem:[%s1038] sm:$0xff]
        %v1040 = vld [vmem:[%s1038 + $0x8] sm:$0xf]
        %v1041 = vunpack.c.l.bf16 %v1039
        %v1042 = vunpack.c.h.bf16 %v1039
        %v1043 = vunpack.c.l.bf16 %v1040
        %v1044 = vadd.f32 %v1041, %v990
        %v1045 = vmul.f32 %v1044, 0.5
        %v1046 = vtanh.pop %v1045
        %v1047 = vmul.f32 %v1046, 0.5
        %v1048 = vadd.f32 %v1047, 0.5
        %v1049 = vadd.f32 %v1042, %v992
        %v1050 = vmul.f32 %v1049, 0.5
        %v1051 = vtanh.pop %v1050
        %v1052 = vmul.f32 %v1051, 0.5
        %v1053 = vadd.f32 %v1052, 0.5
        %v1055 = vlaneseq
        %v1056 = vshrl.u32 %v1055, 7
        %v1057 = vsub.s32 0, %v1056
        %v1058 = vrot.slane %v823, %v1057
        %v1060 = vadd.f32 %v1031, %v1058
        %v1061 = vmul.f32 %v1048, %v1060
        %v1062 = vadd.f32 %v1043, %v1061
        %v1063 = vtanh.pop %v1062
        %v1064 = vsub.f32 1.0, %v1053
        %v1065 = vmul.f32 %v1064, %v1063
        %v1066 = vmul.f32 %v1053, %v824
        %v1067 = vadd.f32 %v1065, %v1066
        %v1068 = vpack.c.bf16 %v1067, %v1067
        %s1069 = smul.addr %s825, 4
        %s1070 = scalar_lea.vmem %s395, %s1069 [#allocation9]
        %1071 = vst [vmem:[%s1070] sm:$0xf] %v1068
        %s1072 = smul.u32 %s34, 5
        %s1073 = sadd.s32 %s1072, 1
        %1074 = vmatprep.subr.bf16.mxu0 %v908
        %1075 = vmatpush1.bf16.msra.mxu0 %v907
        %1076 = vmatprep.subr.bf16.mxu0 %v911
        %1077 = vmatpush1.bf16.msra.mxu0 %v910
        %1078 = vmatprep.subr.bf16.mxu0 %v914
        %1079 = vmatpush1.bf16.msra.mxu0 %v913
        %1080 = vmatprep.subr.bf16.mxu0 %v917
        %1081 = vmatpush1.bf16.msra.mxu0 %v916
        %1082 = vmatprep.subr.bf16.mxu0 %v920
        %1083 = vmatpush1.bf16.msra.mxu0 %v919
        %1084 = vmatprep.subr.bf16.mxu0 %v923
        %1085 = vmatpush1.bf16.msra.mxu0 %v922
        %1086 = vmatprep.subr.bf16.mxu0 %v926
        %1087 = vmatpush1.bf16.msra.mxu0 %v925
        %1088 = vmatprep.subr.bf16.mxu0 %v929
        %1089 = vmatpush1.bf16.msra.mxu0 %v928
        %1090 = vmatprep.subr.bf16.mxu0 0
        %1091 = vmatpush1.bf16.msra.mxu0 0
        %1092 = vmatprep.subr.bf16.mxu0 0
        %1093 = vmatpush1.bf16.msra.mxu0 0
        %1094 = vmatprep.subr.bf16.mxu0 0
        %1095 = vmatpush1.bf16.msra.mxu0 0
        %1096 = vmatprep.subr.bf16.mxu0 0
        %1097 = vmatpush1.bf16.msra.mxu0 0
        %1098 = vmatprep.subr.bf16.mxu0 0
        %1099 = vmatpush1.bf16.msra.mxu0 0
        %1100 = vmatprep.subr.bf16.mxu0 0
        %1101 = vmatpush1.bf16.msra.mxu0 0
        %1102 = vmatprep.subr.bf16.mxu0 0
        %1103 = vmatpush1.bf16.msra.mxu0 0
        %1104 = vmatprep.subr.bf16.mxu0 0
        %1105 = vmatpush1.bf16.msra.mxu0 0
        %1106 = vmatprep.mubr.bf16.mxu0 0
        %1107 = vmatmul.mubr.bf16.gmra.mrb[0].mxu0 %v1068
        %v1108 = vpop.f32.mrb[0].mxu0
        %v1109 = vadd.f32 0.0, %v1108
        %v1110 = vpop.f32.mrb[0].mxu0
        %v1111 = vadd.f32 0.0, %v1110
        %v1112 = vpop.f32.mrb[0].mxu0
        %v1113 = vpop.f32.mrb[0].mxu0
        %1114 = vdwg.mxu0
        %1115 = vmatprep.subr.bf16.mxu0 0
        %1116 = vmatpush1.bf16.msra.mxu0 %v909
        %1117 = vmatprep.subr.bf16.mxu0 0
        %1118 = vmatpush1.bf16.msra.mxu0 %v912
        %1119 = vmatprep.subr.bf16.mxu0 0
        %1120 = vmatpush1.bf16.msra.mxu0 %v915
        %1121 = vmatprep.subr.bf16.mxu0 0
        %1122 = vmatpush1.bf16.msra.mxu0 %v918
        %1123 = vmatprep.subr.bf16.mxu0 0
        %1124 = vmatpush1.bf16.msra.mxu0 %v921
        %1125 = vmatprep.subr.bf16.mxu0 0
        %1126 = vmatpush1.bf16.msra.mxu0 %v924
        %1127 = vmatprep.subr.bf16.mxu0 0
        %1128 = vmatpush1.bf16.msra.mxu0 %v927
        %1129 = vmatprep.subr.bf16.mxu0 0
        %1130 = vmatpush1.bf16.msra.mxu0 %v930
        %1131 = vmatprep.subr.bf16.mxu0 0
        %1132 = vmatpush1.bf16.msra.mxu0 0
        %1133 = vmatprep.subr.bf16.mxu0 0
        %1134 = vmatpush1.bf16.msra.mxu0 0
        %1135 = vmatprep.subr.bf16.mxu0 0
        %1136 = vmatpush1.bf16.msra.mxu0 0
        %1137 = vmatprep.subr.bf16.mxu0 0
        %1138 = vmatpush1.bf16.msra.mxu0 0
        %1139 = vmatprep.subr.bf16.mxu0 0
        %1140 = vmatpush1.bf16.msra.mxu0 0
        %1141 = vmatprep.subr.bf16.mxu0 0
        %1142 = vmatpush1.bf16.msra.mxu0 0
        %1143 = vmatprep.subr.bf16.mxu0 0
        %1144 = vmatpush1.bf16.msra.mxu0 0
        %1145 = vmatprep.subr.bf16.mxu0 0
        %1146 = vmatpush1.bf16.msra.mxu0 0
        %1147 = vmatprep.mubr.bf16.mxu0 0
        %1148 = vmatmul.mubr.bf16.gmra.mrb[0].mxu0 %v1068
        %v1149 = vpop.f32.mrb[0].mxu0
        %v1150 = vadd.f32 0.0, %v1149
        %v1151 = vpop.f32.mrb[0].mxu0
        %v1152 = vpop.f32.mrb[0].mxu0
        %v1153 = vpop.f32.mrb[0].mxu0
        %1154 = vdwg.mxu0
        %s1155 = smul.u32 %s1073, 3
        %s1156 = smul.addr %s1155, 4
        %s1157 = scalar_lea.vmem [#allocation3], %s1156
        %v1158 = vld [vmem:[%s1157] sm:$0xff]
        %v1159 = vld [vmem:[%s1157 + $0x8] sm:$0xf]
        %v1160 = vunpack.c.l.bf16 %v1158
        %v1161 = vunpack.c.h.bf16 %v1158
        %v1162 = vunpack.c.l.bf16 %v1159
        %v1163 = vadd.f32 %v1160, %v1109
        %v1164 = vmul.f32 %v1163, 0.5
        %v1165 = vtanh.pop %v1164
        %v1166 = vmul.f32 %v1165, 0.5
        %v1167 = vadd.f32 %v1166, 0.5
        %v1168 = vadd.f32 %v1161, %v1111
        %v1169 = vmul.f32 %v1168, 0.5
        %v1170 = vtanh.pop %v1169
        %v1171 = vmul.f32 %v1170, 0.5
        %v1172 = vadd.f32 %v1171, 0.5
        %v1173 = vadd.f32 %v1150, %v1058
        %v1174 = vmul.f32 %v1167, %v1173
        %v1175 = vadd.f32 %v1162, %v1174
        %v1176 = vtanh.pop %v1175
        %v1177 = vsub.f32 1.0, %v1172
        %v1178 = vmul.f32 %v1177, %v1176
        %v1179 = vmul.f32 %v1172, %v1067
        %v1180 = vadd.f32 %v1178, %v1179
        %v1181 = vpack.c.bf16 %v1180, %v1180
        %s1182 = smul.addr %s1073, 4
        %s1183 = scalar_lea.vmem %s395, %s1182 [#allocation9]
        %1184 = vst [vmem:[%s1183] sm:$0xf] %v1181
        %s1185 = smul.u32 %s34, 3
        %s1186 = sadd.s32 %s1185, 2
        %1187 = vmatprep.subr.bf16.mxu0 %v908
        %1188 = vmatpush1.bf16.msra.mxu0 %v907
        %1189 = vmatprep.subr.bf16.mxu0 %v911
        %1190 = vmatpush1.bf16.msra.mxu0 %v910
        %1191 = vmatprep.subr.bf16.mxu0 %v914
        %1192 = vmatpush1.bf16.msra.mxu0 %v913
        %1193 = vmatprep.subr.bf16.mxu0 %v917
        %1194 = vmatpush1.bf16.msra.mxu0 %v916
        %1195 = vmatprep.subr.bf16.mxu0 %v920
        %1196 = vmatpush1.bf16.msra.mxu0 %v919
        %1197 = vmatprep.subr.bf16.mxu0 %v923
        %1198 = vmatpush1.bf16.msra.mxu0 %v922
        %1199 = vmatprep.subr.bf16.mxu0 %v926
        %1200 = vmatpush1.bf16.msra.mxu0 %v925
        %1201 = vmatprep.subr.bf16.mxu0 %v929
        %1202 = vmatpush1.bf16.msra.mxu0 %v928
        %1203 = vmatprep.subr.bf16.mxu0 0
        %1204 = vmatpush1.bf16.msra.mxu0 0
        %1205 = vmatprep.subr.bf16.mxu0 0
        %1206 = vmatpush1.bf16.msra.mxu0 0
        %1207 = vmatprep.subr.bf16.mxu0 0
        %1208 = vmatpush1.bf16.msra.mxu0 0
        %1209 = vmatprep.subr.bf16.mxu0 0
        %1210 = vmatpush1.bf16.msra.mxu0 0
        %1211 = vmatprep.subr.bf16.mxu0 0
        %1212 = vmatpush1.bf16.msra.mxu0 0
        %1213 = vmatprep.subr.bf16.mxu0 0
        %1214 = vmatpush1.bf16.msra.mxu0 0
        %1215 = vmatprep.subr.bf16.mxu0 0
        %1216 = vmatpush1.bf16.msra.mxu0 0
        %1217 = vmatprep.subr.bf16.mxu0 0
        %1218 = vmatpush1.bf16.msra.mxu0 0
        %1219 = vmatprep.mubr.bf16.mxu0 0
        %1220 = vmatmul.mubr.bf16.gmra.mrb[0].mxu0 %v1181
        %v1221 = vpop.f32.mrb[0].mxu0
        %v1222 = vadd.f32 0.0, %v1221
        %v1223 = vpop.f32.mrb[0].mxu0
        %v1224 = vadd.f32 0.0, %v1223
        %v1225 = vpop.f32.mrb[0].mxu0
        %v1226 = vpop.f32.mrb[0].mxu0
        %1227 = vdwg.mxu0
        %1228 = vmatprep.subr.bf16.mxu0 0
        %1229 = vmatpush1.bf16.msra.mxu0 %v909
        %1230 = vmatprep.subr.bf16.mxu0 0
        %1231 = vmatpush1.bf16.msra.mxu0 %v912
        %1232 = vmatprep.subr.bf16.mxu0 0
        %1233 = vmatpush1.bf16.msra.mxu0 %v915
        %1234 = vmatprep.subr.bf16.mxu0 0
        %1235 = vmatpush1.bf16.msra.mxu0 %v918
        %1236 = vmatprep.subr.bf16.mxu0 0
        %1237 = vmatpush1.bf16.msra.mxu0 %v921
        %1238 = vmatprep.subr.bf16.mxu0 0
        %1239 = vmatpush1.bf16.msra.mxu0 %v924
        %1240 = vmatprep.subr.bf16.mxu0 0
        %1241 = vmatpush1.bf16.msra.mxu0 %v927
        %1242 = vmatprep.subr.bf16.mxu0 0
        %1243 = vmatpush1.bf16.msra.mxu0 %v930
        %1244 = vmatprep.subr.bf16.mxu0 0
        %1245 = vmatpush1.bf16.msra.mxu0 0
        %1246 = vmatprep.subr.bf16.mxu0 0
        %1247 = vmatpush1.bf16.msra.mxu0 0
        %1248 = vmatprep.subr.bf16.mxu0 0
        %1249 = vmatpush1.bf16.msra.mxu0 0
        %1250 = vmatprep.subr.bf16.mxu0 0
        %1251 = vmatpush1.bf16.msra.mxu0 0
        %1252 = vmatprep.subr.bf16.mxu0 0
        %1253 = vmatpush1.bf16.msra.mxu0 0
        %1254 = vmatprep.subr.bf16.mxu0 0
        %1255 = vmatpush1.bf16.msra.mxu0 0
        %1256 = vmatprep.subr.bf16.mxu0 0
        %1257 = vmatpush1.bf16.msra.mxu0 0
        %1258 = vmatprep.subr.bf16.mxu0 0
        %1259 = vmatpush1.bf16.msra.mxu0 0
        %1260 = vmatprep.mubr.bf16.mxu0 0
        %1261 = vmatmul.mubr.bf16.gmra.mrb[0].mxu0 %v1181
        %v1262 = vpop.f32.mrb[0].mxu0
        %v1263 = vadd.f32 0.0, %v1262
        %v1264 = vpop.f32.mrb[0].mxu0
        %v1265 = vpop.f32.mrb[0].mxu0
        %v1266 = vpop.f32.mrb[0].mxu0
        %1267 = vdwg.mxu0
        %s1268 = smul.u32 %s1186, 3
        %s1269 = smul.addr %s1268, 4
        %s1270 = scalar_lea.vmem [#allocation3], %s1269
        %v1271 = vld [vmem:[%s1270] sm:$0xff]
        %v1272 = vld [vmem:[%s1270 + $0x8] sm:$0xf]
        %v1273 = vunpack.c.l.bf16 %v1271
        %v1274 = vunpack.c.h.bf16 %v1271
        %v1275 = vunpack.c.l.bf16 %v1272
        %v1276 = vadd.f32 %v1273, %v1222
        %v1277 = vmul.f32 %v1276, 0.5
        %v1278 = vtanh.pop %v1277
        %v1279 = vmul.f32 %v1278, 0.5
        %v1280 = vadd.f32 %v1279, 0.5
        %v1281 = vadd.f32 %v1274, %v1224
        %v1282 = vmul.f32 %v1281, 0.5
        %v1283 = vtanh.pop %v1282
        %v1284 = vmul.f32 %v1283, 0.5
        %v1285 = vadd.f32 %v1284, 0.5
        %v1286 = vadd.f32 %v1263, %v1058
        %v1287 = vmul.f32 %v1280, %v1286
        %v1288 = vadd.f32 %v1275, %v1287
        %v1289 = vtanh.pop %v1288
        %v1290 = vsub.f32 1.0, %v1285
        %v1291 = vmul.f32 %v1290, %v1289
        %v1292 = vmul.f32 %v1285, %v1180
        %v1293 = vadd.f32 %v1291, %v1292
        %v1294 = vpack.c.bf16 %v1293, %v1293
        %s1295 = smul.addr %s1186, 4
        %s1296 = scalar_lea.vmem %s395, %s1295 [#allocation9]
        %1297 = vst [vmem:[%s1296] sm:$0xf] %v1294
        %s1298 = sadd.s32 %s34, 3
        %1299 = vmatprep.subr.bf16.mxu0 %v908
        %1300 = vmatpush1.bf16.msra.mxu0 %v907
        %1301 = vmatprep.subr.bf16.mxu0 %v911
        %1302 = vmatpush1.bf16.msra.mxu0 %v910
        %1303 = vmatprep.subr.bf16.mxu0 %v914
        %1304 = vmatpush1.bf16.msra.mxu0 %v913
        %1305 = vmatprep.subr.bf16.mxu0 %v917
        %1306 = vmatpush1.bf16.msra.mxu0 %v916
        %1307 = vmatprep.subr.bf16.mxu0 %v920
        %1308 = vmatpush1.bf16.msra.mxu0 %v919
        %1309 = vmatprep.subr.bf16.mxu0 %v923
        %1310 = vmatpush1.bf16.msra.mxu0 %v922
        %1311 = vmatprep.subr.bf16.mxu0 %v926
        %1312 = vmatpush1.bf16.msra.mxu0 %v925
        %1313 = vmatprep.subr.bf16.mxu0 %v929
        %1314 = vmatpush1.bf16.msra.mxu0 %v928
        %1315 = vmatprep.subr.bf16.mxu0 0
        %1316 = vmatpush1.bf16.msra.mxu0 0
        %1317 = vmatprep.subr.bf16.mxu0 0
        %1318 = vmatpush1.bf16.msra.mxu0 0
        %1319 = vmatprep.subr.bf16.mxu0 0
        %1320 = vmatpush1.bf16.msra.mxu0 0
        %1321 = vmatprep.subr.bf16.mxu0 0
        %1322 = vmatpush1.bf16.msra.mxu0 0
        %1323 = vmatprep.subr.bf16.mxu0 0
        %1324 = vmatpush1.bf16.msra.mxu0 0
        %1325 = vmatprep.subr.bf16.mxu0 0
        %1326 = vmatpush1.bf16.msra.mxu0 0
        %1327 = vmatprep.subr.bf16.mxu0 0
        %1328 = vmatpush1.bf16.msra.mxu0 0
        %1329 = vmatprep.subr.bf16.mxu0 0
        %1330 = vmatpush1.bf16.msra.mxu0 0
        %1331 = vmatprep.mubr.bf16.mxu0 0
        %1332 = vmatmul.mubr.bf16.gmra.mrb[0].mxu0 %v1294
        %v1333 = vpop.f32.mrb[0].mxu0
        %v1334 = vadd.f32 0.0, %v1333
        %v1335 = vpop.f32.mrb[0].mxu0
        %v1336 = vadd.f32 0.0, %v1335
        %v1337 = vpop.f32.mrb[0].mxu0
        %v1338 = vpop.f32.mrb[0].mxu0
        %1339 = vdwg.mxu0
        %1340 = vmatprep.subr.bf16.mxu0 0
        %1341 = vmatpush1.bf16.msra.mxu0 %v909
        %1342 = vmatprep.subr.bf16.mxu0 0
        %1343 = vmatpush1.bf16.msra.mxu0 %v912
        %1344 = vmatprep.subr.bf16.mxu0 0
        %1345 = vmatpush1.bf16.msra.mxu0 %v915
        %1346 = vmatprep.subr.bf16.mxu0 0
        %1347 = vmatpush1.bf16.msra.mxu0 %v918
        %1348 = vmatprep.subr.bf16.mxu0 0
        %1349 = vmatpush1.bf16.msra.mxu0 %v921
        %1350 = vmatprep.subr.bf16.mxu0 0
        %1351 = vmatpush1.bf16.msra.mxu0 %v924
        %1352 = vmatprep.subr.bf16.mxu0 0
        %1353 = vmatpush1.bf16.msra.mxu0 %v927
        %1354 = vmatprep.subr.bf16.mxu0 0
        %1355 = vmatpush1.bf16.msra.mxu0 %v930
        %1356 = vmatprep.subr.bf16.mxu0 0
        %1357 = vmatpush1.bf16.msra.mxu0 0
        %1358 = vmatprep.subr.bf16.mxu0 0
        %1359 = vmatpush1.bf16.msra.mxu0 0
        %1360 = vmatprep.subr.bf16.mxu0 0
        %1361 = vmatpush1.bf16.msra.mxu0 0
        %1362 = vmatprep.subr.bf16.mxu0 0
        %1363 = vmatpush1.bf16.msra.mxu0 0
        %1364 = vmatprep.subr.bf16.mxu0 0
        %1365 = vmatpush1.bf16.msra.mxu0 0
        %1366 = vmatprep.subr.bf16.mxu0 0
        %1367 = vmatpush1.bf16.msra.mxu0 0
        %1368 = vmatprep.subr.bf16.mxu0 0
        %1369 = vmatpush1.bf16.msra.mxu0 0
        %1370 = vmatprep.subr.bf16.mxu0 0
        %1371 = vmatpush1.bf16.msra.mxu0 0
        %1372 = vmatprep.mubr.bf16.mxu0 0
        %1373 = vmatmul.mubr.bf16.gmra.mrb[0].mxu0 %v1294
        %v1374 = vpop.f32.mrb[0].mxu0
        %v1375 = vadd.f32 0.0, %v1374
        %v1376 = vpop.f32.mrb[0].mxu0
        %v1377 = vpop.f32.mrb[0].mxu0
        %v1378 = vpop.f32.mrb[0].mxu0
        %1379 = vdwg.mxu0
        %s1380 = smul.u32 %s1298, 3
        %s1381 = smul.addr %s1380, 4
        %s1382 = scalar_lea.vmem [#allocation3], %s1381
        %v1383 = vld [vmem:[%s1382] sm:$0xff]
        %v1384 = vld [vmem:[%s1382 + $0x8] sm:$0xf]
        %v1385 = vunpack.c.l.bf16 %v1383
        %v1386 = vunpack.c.h.bf16 %v1383
        %v1387 = vunpack.c.l.bf16 %v1384
        %v1388 = vadd.f32 %v1385, %v1334
        %v1389 = vmul.f32 %v1388, 0.5
        %v1390 = vtanh.pop %v1389
        %v1391 = vmul.f32 %v1390, 0.5
        %v1392 = vadd.f32 %v1391, 0.5
        %v1393 = vadd.f32 %v1386, %v1336
        %v1394 = vmul.f32 %v1393, 0.5
        %v1395 = vtanh.pop %v1394
        %v1396 = vmul.f32 %v1395, 0.5
        %v1397 = vadd.f32 %v1396, 0.5
        %v1398 = vadd.f32 %v1375, %v1058
        %v1399 = vmul.f32 %v1392, %v1398
        %v1400 = vadd.f32 %v1387, %v1399
        %v1401 = vtanh.pop %v1400
        %v1402 = vsub.f32 1.0, %v1397
        %v1403 = vmul.f32 %v1402, %v1401
        %v1404 = vmul.f32 %v1397, %v1293
        %v1405 = vadd.f32 %v1403, %v1404
        %v1406 = vpack.c.bf16 %v1405, %v1405
        %s1407 = smul.addr %s1298, 4
        %s1408 = scalar_lea.vmem %s395, %s1407 [#allocation9]
        %1409 = vst [vmem:[%s1408] sm:$0xf] %v1406
        %s1410 = ssub.s32 4, %s34
        %1411 = vmatprep.subr.bf16.mxu0 %v908
        %1412 = vmatpush1.bf16.msra.mxu0 %v907
        %1413 = vmatprep.subr.bf16.mxu0 %v911
        %1414 = vmatpush1.bf16.msra.mxu0 %v910
        %1415 = vmatprep.subr.bf16.mxu0 %v914
        %1416 = vmatpush1.bf16.msra.mxu0 %v913
        %1417 = vmatprep.subr.bf16.mxu0 %v917
        %1418 = vmatpush1.bf16.msra.mxu0 %v916
        %1419 = vmatprep.subr.bf16.mxu0 %v920
        %1420 = vmatpush1.bf16.msra.mxu0 %v919
        %1421 = vmatprep.subr.bf16.mxu0 %v923
        %1422 = vmatpush1.bf16.msra.mxu0 %v922
        %1423 = vmatprep.subr.bf16.mxu0 %v926
        %1424 = vmatpush1.bf16.msra.mxu0 %v925
        %1425 = vmatprep.subr.bf16.mxu0 %v929
        %1426 = vmatpush1.bf16.msra.mxu0 %v928
        %1427 = vmatprep.subr.bf16.mxu0 0
        %1428 = vmatpush1.bf16.msra.mxu0 0
        %1429 = vmatprep.subr.bf16.mxu0 0
        %1430 = vmatpush1.bf16.msra.mxu0 0
        %1431 = vmatprep.subr.bf16.mxu0 0
        %1432 = vmatpush1.bf16.msra.mxu0 0
        %1433 = vmatprep.subr.bf16.mxu0 0
        %1434 = vmatpush1.bf16.msra.mxu0 0
        %1435 = vmatprep.subr.bf16.mxu0 0
        %1436 = vmatpush1.bf16.msra.mxu0 0
        %1437 = vmatprep.subr.bf16.mxu0 0
        %1438 = vmatpush1.bf16.msra.mxu0 0
        %1439 = vmatprep.subr.bf16.mxu0 0
        %1440 = vmatpush1.bf16.msra.mxu0 0
        %1441 = vmatprep.subr.bf16.mxu0 0
        %1442 = vmatpush1.bf16.msra.mxu0 0
        %1443 = vmatprep.mubr.bf16.mxu0 0
        %1444 = vmatmul.mubr.bf16.gmra.mrb[0].mxu0 %v1406
        %v1445 = vpop.f32.mrb[0].mxu0
        %v1446 = vadd.f32 0.0, %v1445
        %v1447 = vpop.f32.mrb[0].mxu0
        %v1448 = vadd.f32 0.0, %v1447
        %v1449 = vpop.f32.mrb[0].mxu0
        %v1450 = vpop.f32.mrb[0].mxu0
        %1451 = vdwg.mxu0
        %1452 = vmatprep.subr.bf16.mxu0 0
        %1453 = vmatpush1.bf16.msra.mxu0 %v909
        %1454 = vmatprep.subr.bf16.mxu0 0
        %1455 = vmatpush1.bf16.msra.mxu0 %v912
        %1456 = vmatprep.subr.bf16.mxu0 0
        %1457 = vmatpush1.bf16.msra.mxu0 %v915
        %1458 = vmatprep.subr.bf16.mxu0 0
        %1459 = vmatpush1.bf16.msra.mxu0 %v918
        %1460 = vmatprep.subr.bf16.mxu0 0
        %1461 = vmatpush1.bf16.msra.mxu0 %v921
        %1462 = vmatprep.subr.bf16.mxu0 0
        %1463 = vmatpush1.bf16.msra.mxu0 %v924
        %1464 = vmatprep.subr.bf16.mxu0 0
        %1465 = vmatpush1.bf16.msra.mxu0 %v927
        %1466 = vmatprep.subr.bf16.mxu0 0
        %1467 = vmatpush1.bf16.msra.mxu0 %v930
        %1468 = vmatprep.subr.bf16.mxu0 0
        %1469 = vmatpush1.bf16.msra.mxu0 0
        %1470 = vmatprep.subr.bf16.mxu0 0
        %1471 = vmatpush1.bf16.msra.mxu0 0
        %1472 = vmatprep.subr.bf16.mxu0 0
        %1473 = vmatpush1.bf16.msra.mxu0 0
        %1474 = vmatprep.subr.bf16.mxu0 0
        %1475 = vmatpush1.bf16.msra.mxu0 0
        %1476 = vmatprep.subr.bf16.mxu0 0
        %1477 = vmatpush1.bf16.msra.mxu0 0
        %1478 = vmatprep.subr.bf16.mxu0 0
        %1479 = vmatpush1.bf16.msra.mxu0 0
        %1480 = vmatprep.subr.bf16.mxu0 0
        %1481 = vmatpush1.bf16.msra.mxu0 0
        %1482 = vmatprep.subr.bf16.mxu0 0
        %1483 = vmatpush1.bf16.msra.mxu0 0
        %1484 = vmatprep.mubr.bf16.mxu0 0
        %1485 = vmatmul.mubr.bf16.gmra.mrb[0].mxu0 %v1406
        %v1486 = vpop.f32.mrb[0].mxu0
        %v1487 = vadd.f32 0.0, %v1486
        %v1488 = vpop.f32.mrb[0].mxu0
        %v1489 = vpop.f32.mrb[0].mxu0
        %v1490 = vpop.f32.mrb[0].mxu0
        %1491 = vdwg.mxu0
        %s1492 = smul.u32 %s1410, 3
        %s1493 = smul.addr %s1492, 4
        %s1494 = scalar_lea.vmem [#allocation3], %s1493
        %v1495 = vld [vmem:[%s1494] sm:$0xff]
        %v1496 = vld [vmem:[%s1494 + $0x8] sm:$0xf]
        %v1497 = vunpack.c.l.bf16 %v1495
        %v1498 = vunpack.c.h.bf16 %v1495
        %v1499 = vunpack.c.l.bf16 %v1496
        %v1500 = vadd.f32 %v1497, %v1446
        %v1501 = vmul.f32 %v1500, 0.5
        %v1502 = vtanh.pop %v1501
        %v1503 = vmul.f32 %v1502, 0.5
        %v1504 = vadd.f32 %v1503, 0.5
        %v1505 = vadd.f32 %v1498, %v1448
        %v1506 = vmul.f32 %v1505, 0.5
        %v1507 = vtanh.pop %v1506
        %v1508 = vmul.f32 %v1507, 0.5
        %v1509 = vadd.f32 %v1508, 0.5
        %v1510 = vadd.f32 %v1487, %v1058
        %v1511 = vmul.f32 %v1504, %v1510
        %v1512 = vadd.f32 %v1499, %v1511
        %v1513 = vtanh.pop %v1512
        %v1514 = vsub.f32 1.0, %v1509
        %v1515 = vmul.f32 %v1514, %v1513
        %v1516 = vmul.f32 %v1509, %v1405
        %v1517 = vadd.f32 %v1515, %v1516
        %v1518 = vpack.c.bf16 %v1517, %v1517
        %s1519 = smul.addr %s1410, 4
        %s1520 = scalar_lea.vmem %s395, %s1519 [#allocation9]
        %1521 = vst [vmem:[%s1520] sm:$0xf] %v1518
        %s1522 = smul.u32 %s34, 4294967293
        %s1523 = sadd.s32 %s1522, 5
        %1524 = vmatprep.subr.bf16.mxu0 %v908
        %1525 = vmatpush1.bf16.msra.mxu0 %v907
        %1526 = vmatprep.subr.bf16.mxu0 %v911
        %1527 = vmatpush1.bf16.msra.mxu0 %v910
        %1528 = vmatprep.subr.bf16.mxu0 %v914
        %1529 = vmatpush1.bf16.msra.mxu0 %v913
        %1530 = vmatprep.subr.bf16.mxu0 %v917
        %1531 = vmatpush1.bf16.msra.mxu0 %v916
        %1532 = vmatprep.subr.bf16.mxu0 %v920
        %1533 = vmatpush1.bf16.msra.mxu0 %v919
        %1534 = vmatprep.subr.bf16.mxu0 %v923
        %1535 = vmatpush1.bf16.msra.mxu0 %v922
        %1536 = vmatprep.subr.bf16.mxu0 %v926
        %1537 = vmatpush1.bf16.msra.mxu0 %v925
        %1538 = vmatprep.subr.bf16.mxu0 %v929
        %1539 = vmatpush1.bf16.msra.mxu0 %v928
        %1540 = vmatprep.subr.bf16.mxu0 0
        %1541 = vmatpush1.bf16.msra.mxu0 0
        %1542 = vmatprep.subr.bf16.mxu0 0
        %1543 = vmatpush1.bf16.msra.mxu0 0
        %1544 = vmatprep.subr.bf16.mxu0 0
        %1545 = vmatpush1.bf16.msra.mxu0 0
        %1546 = vmatprep.subr.bf16.mxu0 0
        %1547 = vmatpush1.bf16.msra.mxu0 0
        %1548 = vmatprep.subr.bf16.mxu0 0
        %1549 = vmatpush1.bf16.msra.mxu0 0
        %1550 = vmatprep.subr.bf16.mxu0 0
        %1551 = vmatpush1.bf16.msra.mxu0 0
        %1552 = vmatprep.subr.bf16.mxu0 0
        %1553 = vmatpush1.bf16.msra.mxu0 0
        %1554 = vmatprep.subr.bf16.mxu0 0
        %1555 = vmatpush1.bf16.msra.mxu0 0
        %1556 = vmatprep.mubr.bf16.mxu0 0
        %1557 = vmatmul.mubr.bf16.gmra.mrb[0].mxu0 %v1518
        %v1558 = vpop.f32.mrb[0].mxu0
        %v1559 = vadd.f32 0.0, %v1558
        %v1560 = vpop.f32.mrb[0].mxu0
        %v1561 = vadd.f32 0.0, %v1560
        %v1562 = vpop.f32.mrb[0].mxu0
        %v1563 = vpop.f32.mrb[0].mxu0
        %1564 = vdwg.mxu0
        %1565 = vmatprep.subr.bf16.mxu0 0
        %1566 = vmatpush1.bf16.msra.mxu0 %v909
        %1567 = vmatprep.subr.bf16.mxu0 0
        %1568 = vmatpush1.bf16.msra.mxu0 %v912
        %1569 = vmatprep.subr.bf16.mxu0 0
        %1570 = vmatpush1.bf16.msra.mxu0 %v915
        %1571 = vmatprep.subr.bf16.mxu0 0
        %1572 = vmatpush1.bf16.msra.mxu0 %v918
        %1573 = vmatprep.subr.bf16.mxu0 0
        %1574 = vmatpush1.bf16.msra.mxu0 %v921
        %1575 = vmatprep.subr.bf16.mxu0 0
        %1576 = vmatpush1.bf16.msra.mxu0 %v924
        %1577 = vmatprep.subr.bf16.mxu0 0
        %1578 = vmatpush1.bf16.msra.mxu0 %v927
        %1579 = vmatprep.subr.bf16.mxu0 0
        %1580 = vmatpush1.bf16.msra.mxu0 %v930
        %1581 = vmatprep.subr.bf16.mxu0 0
        %1582 = vmatpush1.bf16.msra.mxu0 0
        %1583 = vmatprep.subr.bf16.mxu0 0
        %1584 = vmatpush1.bf16.msra.mxu0 0
        %1585 = vmatprep.subr.bf16.mxu0 0
        %1586 = vmatpush1.bf16.msra.mxu0 0
        %1587 = vmatprep.subr.bf16.mxu0 0
        %1588 = vmatpush1.bf16.msra.mxu0 0
        %1589 = vmatprep.subr.bf16.mxu0 0
        %1590 = vmatpush1.bf16.msra.mxu0 0
        %1591 = vmatprep.subr.bf16.mxu0 0
        %1592 = vmatpush1.bf16.msra.mxu0 0
        %1593 = vmatprep.subr.bf16.mxu0 0
        %1594 = vmatpush1.bf16.msra.mxu0 0
        %1595 = vmatprep.subr.bf16.mxu0 0
        %1596 = vmatpush1.bf16.msra.mxu0 0
        %1597 = vmatprep.mubr.bf16.mxu0 0
        %1598 = vmatmul.mubr.bf16.gmra.mrb[0].mxu0 %v1518
        %v1599 = vpop.f32.mrb[0].mxu0
        %v1600 = vadd.f32 0.0, %v1599
        %v1601 = vpop.f32.mrb[0].mxu0
        %v1602 = vpop.f32.mrb[0].mxu0
        %v1603 = vpop.f32.mrb[0].mxu0
        %1604 = vdwg.mxu0
        %s1605 = smul.u32 %s1523, 3
        %s1606 = smul.addr %s1605, 4
        %s1607 = scalar_lea.vmem [#allocation3], %s1606
        %v1608 = vld [vmem:[%s1607] sm:$0xff]
        %v1609 = vld [vmem:[%s1607 + $0x8] sm:$0xf]
        %v1610 = vunpack.c.l.bf16 %v1608
        %v1611 = vunpack.c.h.bf16 %v1608
        %v1612 = vunpack.c.l.bf16 %v1609
        %v1613 = vadd.f32 %v1610, %v1559
        %v1614 = vmul.f32 %v1613, 0.5
        %v1615 = vtanh.pop %v1614
        %v1616 = vmul.f32 %v1615, 0.5
        %v1617 = vadd.f32 %v1616, 0.5
        %v1618 = vadd.f32 %v1611, %v1561
        %v1619 = vmul.f32 %v1618, 0.5
        %v1620 = vtanh.pop %v1619
        %v1621 = vmul.f32 %v1620, 0.5
        %v1622 = vadd.f32 %v1621, 0.5
        %v1623 = vadd.f32 %v1600, %v1058
        %v1624 = vmul.f32 %v1617, %v1623
        %v1625 = vadd.f32 %v1612, %v1624
        %v1626 = vtanh.pop %v1625
        %v1627 = vsub.f32 1.0, %v1622
        %v1628 = vmul.f32 %v1627, %v1626
        %v1629 = vmul.f32 %v1622, %v1517
        %v1630 = vadd.f32 %v1628, %v1629
        %v1631 = vpack.c.bf16 %v1630, %v1630
        %s1632 = smul.addr %s1523, 4
        %s1633 = scalar_lea.vmem %s395, %s1632 [#allocation9]
        %1634 = vst [vmem:[%s1633] sm:$0xf] %v1631
        %s1635 = smul.u32 %s34, 4294967291
        %s1636 = sadd.s32 %s1635, 6
        %1637 = vmatprep.subr.bf16.mxu0 %v908
        %1638 = vmatpush1.bf16.msra.mxu0 %v907
        %1639 = vmatprep.subr.bf16.mxu0 %v911
        %1640 = vmatpush1.bf16.msra.mxu0 %v910
        %1641 = vmatprep.subr.bf16.mxu0 %v914
        %1642 = vmatpush1.bf16.msra.mxu0 %v913
        %1643 = vmatprep.subr.bf16.mxu0 %v917
        %1644 = vmatpush1.bf16.msra.mxu0 %v916
        %1645 = vmatprep.subr.bf16.mxu0 %v920
        %1646 = vmatpush1.bf16.msra.mxu0 %v919
        %1647 = vmatprep.subr.bf16.mxu0 %v923
        %1648 = vmatpush1.bf16.msra.mxu0 %v922
        %1649 = vmatprep.subr.bf16.mxu0 %v926
        %1650 = vmatpush1.bf16.msra.mxu0 %v925
        %1651 = vmatprep.subr.bf16.mxu0 %v929
        %1652 = vmatpush1.bf16.msra.mxu0 %v928
        %1653 = vmatprep.subr.bf16.mxu0 0
        %1654 = vmatpush1.bf16.msra.mxu0 0
        %1655 = vmatprep.subr.bf16.mxu0 0
        %1656 = vmatpush1.bf16.msra.mxu0 0
        %1657 = vmatprep.subr.bf16.mxu0 0
        %1658 = vmatpush1.bf16.msra.mxu0 0
        %1659 = vmatprep.subr.bf16.mxu0 0
        %1660 = vmatpush1.bf16.msra.mxu0 0
        %1661 = vmatprep.subr.bf16.mxu0 0
        %1662 = vmatpush1.bf16.msra.mxu0 0
        %1663 = vmatprep.subr.bf16.mxu0 0
        %1664 = vmatpush1.bf16.msra.mxu0 0
        %1665 = vmatprep.subr.bf16.mxu0 0
        %1666 = vmatpush1.bf16.msra.mxu0 0
        %1667 = vmatprep.subr.bf16.mxu0 0
        %1668 = vmatpush1.bf16.msra.mxu0 0
        %1669 = vmatprep.mubr.bf16.mxu0 0
        %1670 = vmatmul.mubr.bf16.gmra.mrb[0].mxu0 %v1631
        %v1671 = vpop.f32.mrb[0].mxu0
        %v1672 = vadd.f32 0.0, %v1671
        %v1673 = vpop.f32.mrb[0].mxu0
        %v1674 = vadd.f32 0.0, %v1673
        %v1675 = vpop.f32.mrb[0].mxu0
        %v1676 = vpop.f32.mrb[0].mxu0
        %1677 = vdwg.mxu0
        %1678 = vmatprep.subr.bf16.mxu0 0
        %1679 = vmatpush1.bf16.msra.mxu0 %v909
        %1680 = vmatprep.subr.bf16.mxu0 0
        %1681 = vmatpush1.bf16.msra.mxu0 %v912
        %1682 = vmatprep.subr.bf16.mxu0 0
        %1683 = vmatpush1.bf16.msra.mxu0 %v915
        %1684 = vmatprep.subr.bf16.mxu0 0
        %1685 = vmatpush1.bf16.msra.mxu0 %v918
        %1686 = vmatprep.subr.bf16.mxu0 0
        %1687 = vmatpush1.bf16.msra.mxu0 %v921
        %1688 = vmatprep.subr.bf16.mxu0 0
        %1689 = vmatpush1.bf16.msra.mxu0 %v924
        %1690 = vmatprep.subr.bf16.mxu0 0
        %1691 = vmatpush1.bf16.msra.mxu0 %v927
        %1692 = vmatprep.subr.bf16.mxu0 0
        %1693 = vmatpush1.bf16.msra.mxu0 %v930
        %1694 = vmatprep.subr.bf16.mxu0 0
        %1695 = vmatpush1.bf16.msra.mxu0 0
        %1696 = vmatprep.subr.bf16.mxu0 0
        %1697 = vmatpush1.bf16.msra.mxu0 0
        %1698 = vmatprep.subr.bf16.mxu0 0
        %1699 = vmatpush1.bf16.msra.mxu0 0
        %1700 = vmatprep.subr.bf16.mxu0 0
        %1701 = vmatpush1.bf16.msra.mxu0 0
        %1702 = vmatprep.subr.bf16.mxu0 0
        %1703 = vmatpush1.bf16.msra.mxu0 0
        %1704 = vmatprep.subr.bf16.mxu0 0
        %1705 = vmatpush1.bf16.msra.mxu0 0
        %1706 = vmatprep.subr.bf16.mxu0 0
        %1707 = vmatpush1.bf16.msra.mxu0 0
        %1708 = vmatprep.subr.bf16.mxu0 0
        %1709 = vmatpush1.bf16.msra.mxu0 0
        %1710 = vmatprep.mubr.bf16.mxu0 0
        %1711 = vmatmul.mubr.bf16.gmra.mrb[0].mxu0 %v1631
        %v1712 = vpop.f32.mrb[0].mxu0
        %v1713 = vadd.f32 0.0, %v1712
        %v1714 = vpop.f32.mrb[0].mxu0
        %v1715 = vpop.f32.mrb[0].mxu0
        %v1716 = vpop.f32.mrb[0].mxu0
        %1717 = vdwg.mxu0
        %s1718 = smul.u32 %s1636, 3
        %s1719 = smul.addr %s1718, 4
        %s1720 = scalar_lea.vmem [#allocation3], %s1719
        %v1721 = vld [vmem:[%s1720] sm:$0xff]
        %v1722 = vld [vmem:[%s1720 + $0x8] sm:$0xf]
        %v1723 = vunpack.c.l.bf16 %v1721
        %v1724 = vunpack.c.h.bf16 %v1721
        %v1725 = vunpack.c.l.bf16 %v1722
        %v1726 = vadd.f32 %v1723, %v1672
        %v1727 = vmul.f32 %v1726, 0.5
        %v1728 = vtanh.pop %v1727
        %v1729 = vmul.f32 %v1728, 0.5
        %v1730 = vadd.f32 %v1729, 0.5
        %v1731 = vadd.f32 %v1724, %v1674
        %v1732 = vmul.f32 %v1731, 0.5
        %v1733 = vtanh.pop %v1732
        %v1734 = vmul.f32 %v1733, 0.5
        %v1735 = vadd.f32 %v1734, 0.5
        %v1736 = vadd.f32 %v1713, %v1058
        %v1737 = vmul.f32 %v1730, %v1736
        %v1738 = vadd.f32 %v1725, %v1737
        %v1739 = vtanh.pop %v1738
        %v1740 = vsub.f32 1.0, %v1735
        %v1741 = vmul.f32 %v1740, %v1739
        %v1742 = vmul.f32 %v1735, %v1630
        %v1743 = vadd.f32 %v1741, %v1742
        %v1744 = vpack.c.bf16 %v1743, %v1743
        %s1745 = smul.addr %s1636, 4
        %s1746 = scalar_lea.vmem %s395, %s1745 [#allocation9]
        %1747 = vst [vmem:[%s1746] sm:$0xf] %v1744
        %s1748 = smul.u32 %s34, 4294967289
        %s1749 = sadd.s32 %s1748, 7
        %1750 = vmatprep.subr.bf16.mxu0 %v908
        %1751 = vmatpush1.bf16.msra.mxu0 %v907
        %1752 = vmatprep.subr.bf16.mxu0 %v911
        %1753 = vmatpush1.bf16.msra.mxu0 %v910
        %1754 = vmatprep.subr.bf16.mxu0 %v914
        %1755 = vmatpush1.bf16.msra.mxu0 %v913
        %1756 = vmatprep.subr.bf16.mxu0 %v917
        %1757 = vmatpush1.bf16.msra.mxu0 %v916
        %1758 = vmatprep.subr.bf16.mxu0 %v920
        %1759 = vmatpush1.bf16.msra.mxu0 %v919
        %1760 = vmatprep.subr.bf16.mxu0 %v923
        %1761 = vmatpush1.bf16.msra.mxu0 %v922
        %1762 = vmatprep.subr.bf16.mxu0 %v926
        %1763 = vmatpush1.bf16.msra.mxu0 %v925
        %1764 = vmatprep.subr.bf16.mxu0 %v929
        %1765 = vmatpush1.bf16.msra.mxu0 %v928
        %1766 = vmatprep.subr.bf16.mxu0 0
        %1767 = vmatpush1.bf16.msra.mxu0 0
        %1768 = vmatprep.subr.bf16.mxu0 0
        %1769 = vmatpush1.bf16.msra.mxu0 0
        %1770 = vmatprep.subr.bf16.mxu0 0
        %1771 = vmatpush1.bf16.msra.mxu0 0
        %1772 = vmatprep.subr.bf16.mxu0 0
        %1773 = vmatpush1.bf16.msra.mxu0 0
        %1774 = vmatprep.subr.bf16.mxu0 0
        %1775 = vmatpush1.bf16.msra.mxu0 0
        %1776 = vmatprep.subr.bf16.mxu0 0
        %1777 = vmatpush1.bf16.msra.mxu0 0
        %1778 = vmatprep.subr.bf16.mxu0 0
        %1779 = vmatpush1.bf16.msra.mxu0 0
        %1780 = vmatprep.subr.bf16.mxu0 0
        %1781 = vmatpush1.bf16.msra.mxu0 0
        %1782 = vmatprep.mubr.bf16.mxu0 0
        %1783 = vmatmul.mubr.bf16.gmra.mrb[0].mxu0 %v1744
        %v1784 = vpop.f32.mrb[0].mxu0
        %v1785 = vadd.f32 0.0, %v1784
        %v1786 = vpop.f32.mrb[0].mxu0
        %v1787 = vadd.f32 0.0, %v1786
        %v1788 = vpop.f32.mrb[0].mxu0
        %v1789 = vpop.f32.mrb[0].mxu0
        %1790 = vdwg.mxu0
        %1791 = vmatprep.subr.bf16.mxu0 0
        %1792 = vmatpush1.bf16.msra.mxu0 %v909
        %1793 = vmatprep.subr.bf16.mxu0 0
        %1794 = vmatpush1.bf16.msra.mxu0 %v912
        %1795 = vmatprep.subr.bf16.mxu0 0
        %1796 = vmatpush1.bf16.msra.mxu0 %v915
        %1797 = vmatprep.subr.bf16.mxu0 0
        %1798 = vmatpush1.bf16.msra.mxu0 %v918
        %1799 = vmatprep.subr.bf16.mxu0 0
        %1800 = vmatpush1.bf16.msra.mxu0 %v921
        %1801 = vmatprep.subr.bf16.mxu0 0
        %1802 = vmatpush1.bf16.msra.mxu0 %v924
        %1803 = vmatprep.subr.bf16.mxu0 0
        %1804 = vmatpush1.bf16.msra.mxu0 %v927
        %1805 = vmatprep.subr.bf16.mxu0 0
        %1806 = vmatpush1.bf16.msra.mxu0 %v930
        %1807 = vmatprep.subr.bf16.mxu0 0
        %1808 = vmatpush1.bf16.msra.mxu0 0
        %1809 = vmatprep.subr.bf16.mxu0 0
        %1810 = vmatpush1.bf16.msra.mxu0 0
        %1811 = vmatprep.subr.bf16.mxu0 0
        %1812 = vmatpush1.bf16.msra.mxu0 0
        %1813 = vmatprep.subr.bf16.mxu0 0
        %1814 = vmatpush1.bf16.msra.mxu0 0
        %1815 = vmatprep.subr.bf16.mxu0 0
        %1816 = vmatpush1.bf16.msra.mxu0 0
        %1817 = vmatprep.subr.bf16.mxu0 0
        %1818 = vmatpush1.bf16.msra.mxu0 0
        %1819 = vmatprep.subr.bf16.mxu0 0
        %1820 = vmatpush1.bf16.msra.mxu0 0
        %1821 = vmatprep.subr.bf16.mxu0 0
        %1822 = vmatpush1.bf16.msra.mxu0 0
        %1823 = vmatprep.mubr.bf16.mxu0 0
        %1824 = vmatmul.mubr.bf16.gmra.mrb[0].mxu0 %v1744
        %v1825 = vpop.f32.mrb[0].mxu0
        %v1826 = vadd.f32 0.0, %v1825
        %v1827 = vpop.f32.mrb[0].mxu0
        %v1828 = vpop.f32.mrb[0].mxu0
        %v1829 = vpop.f32.mrb[0].mxu0
        %1830 = vdwg.mxu0
        %s1831 = smul.u32 %s1749, 3
        %s1832 = smul.addr %s1831, 4
        %s1833 = scalar_lea.vmem [#allocation3], %s1832
        %v1834 = vld [vmem:[%s1833] sm:$0xff]
        %v1835 = vld [vmem:[%s1833 + $0x8] sm:$0xf]
        %v1836 = vunpack.c.l.bf16 %v1834
        %v1837 = vunpack.c.h.bf16 %v1834
        %v1838 = vunpack.c.l.bf16 %v1835
        %v1839 = vadd.f32 %v1836, %v1785
        %v1840 = vmul.f32 %v1839, 0.5
        %v1841 = vtanh.pop %v1840
        %v1842 = vmul.f32 %v1841, 0.5
        %v1843 = vadd.f32 %v1842, 0.5
        %v1844 = vadd.f32 %v1837, %v1787
        %v1845 = vmul.f32 %v1844, 0.5
        %v1846 = vtanh.pop %v1845
        %v1847 = vmul.f32 %v1846, 0.5
        %v1848 = vadd.f32 %v1847, 0.5
        %v1849 = vadd.f32 %v1826, %v1058
        %v1850 = vmul.f32 %v1843, %v1849
        %v1851 = vadd.f32 %v1838, %v1850
        %v1852 = vtanh.pop %v1851
        %v1853 = vsub.f32 1.0, %v1848
        %v1854 = vmul.f32 %v1853, %v1852
        %v1855 = vmul.f32 %v1848, %v1743
        %v1856 = vadd.f32 %v1854, %v1855
        %v1857 = vpack.c.bf16 %v1856, %v1856
        %s1858 = smul.addr %s1749, 4
        %s1859 = scalar_lea.vmem %s395, %s1858 [#allocation9]
        %1860 = vst [vmem:[%s1859] sm:$0xf] %v1857
        %1861 = vst [vmem:[#allocation2] sm:$0xff] %v1856
        // Predicated region
        $region53: #{tpu_custom_call.1} parent=39 // pred_check
          %p1862 = pneg %p430
        $region54: #{tpu_custom_call.1} parent=39 // pred_check_branch
          %1864 = sbr.rel (%p1862) target = $region56
        $region55: #{tpu_custom_call.1} parent=39 // pred_region
          %1865 = vst [vmem:[%s402] sm:$0xff] %v1856
        $region56: #{tpu_custom_call.1} parent=39 // pred_fallthru
          _
        %s1866 = sand.u32 %s198, 1
        %s1867 = scalar_lea.sflag [#allocation6], %s1866
        %s1868 = sand.u32 %s198, 1
        %s1869 = smul.addr %s1868, 32
        %s1870 = scalar_lea.vmem [#allocation9], %s1869
        %s1871 = sand.u32 %s224, 1
        %s1872 = scalar_lea.sflag [#allocation11], %s1871
        %s1873 = sand.u32 %s224, 1
        %s1874 = smul.addr %s1873, 8
        %s1875 = scalar_lea.vmem [#allocation10], %s1874
        // Predicated region
        $region57: #{tpu_custom_call.1} parent=39 // pred_check
          %p1876 = pneg %p208
        $region58: #{tpu_custom_call.1} parent=39 // pred_check_branch
          %1878 = sbr.rel (%p1876) target = $region60
        $region59: #{tpu_custom_call.1} parent=39 // pred_region
          %s1879 = smul.u32 %s35, 2
          %s1880 = ssub.s32 0, %s1879
          %s1881 = smul.u32 %s34, %s1880
          %s1882 = sadd.s32 %s35, %s1881
          %s1883 = smul.u32 8, %s1882
          %s1885 = ssub.s32 512, 512
          %1886 = vsyncadd %s1867, %s1885
          %s1887 = smul.addr %s1883, 2
          %s1888 = sadd.s32 %s34, %s1887
          %s1889 = smul.addr %s1888, 64
          %s1890 = scalar_lea.hbm %s5, %s1889
          %s1891 = sshll.u32 %s1870, 4
          %s1892 = int_to_ptr.vmem [resolvable:$true] %s1891
          %1897 = dma.vmem_to_hbm [thread:$0]  %s1892, 512, %s1890, %s1867, 64, 128, 4
        $region60: #{tpu_custom_call.1} parent=39 // pred_fallthru
          _
        // Predicated region
        $region61: #{tpu_custom_call.1} parent=39 // pred_check
          %p1898 = pneg %p234
        $region62: #{tpu_custom_call.1} parent=39 // pred_check_branch
          %1900 = sbr.rel (%p1898) target = $region64
        $region63: #{tpu_custom_call.1} parent=39 // pred_region
          %s1902 = ssub.s32 128, 128
          %1903 = vsyncadd %s1872, %s1902
          %s1904 = smul.addr %s34, 128
          %s1905 = scalar_lea.hbm %s6, %s1904
          %s1907 = sshll.u32 %s1875, 4
          %s1908 = int_to_ptr.vmem [resolvable:$true] %s1907
          %1910 = dma.vmem_to_hbm [thread:$0]  %s1908, 128, %s1905, %s1872
        $region64: #{tpu_custom_call.1} parent=39 // pred_fallthru
          _
      $region40: #{tpu_custom_call.1} parent=5 // pred_fallthru
        _
      %p1911 = scmp.le.s32.totalorder 2, %s25
      // Predicated region
      $region65: #{tpu_custom_call.1} parent=5 // pred_check
        %p1912 = pneg %p1911
      $region66: #{tpu_custom_call.1} parent=5 // pred_check_branch
        %1914 = sbr.rel (%p1912) target = $region68
      $region67: #{tpu_custom_call.1} parent=5 // pred_region
        %s1915 = ssub.s32 %s25, 2
        // Predicated region
        $region69: #{tpu_custom_call.1} parent=67 // pred_check
          %p1916 = pneg %p214
        $region70: #{tpu_custom_call.1} parent=67 // pred_check_branch
          %1918 = sbr.rel (%p1916) target = $region72
        $region71: #{tpu_custom_call.1} parent=67 // pred_region
          %s1919 = sand.u32 %s199, 1
          %s1920 = scalar_lea.sflag [#allocation6], %s1919
          %s1921 = sand.u32 %s199, 1
          %s1922 = smul.addr %s1921, 32
          %s1923 = scalar_lea.vmem [#allocation9], %s1922
          %1924 = dma.done %s1920, 512
        $region72: #{tpu_custom_call.1} parent=67 // pred_fallthru
          _
        // Predicated region
        $region73: #{tpu_custom_call.1} parent=67 // pred_check
          %p1925 = pneg %p240
        $region74: #{tpu_custom_call.1} parent=67 // pred_check_branch
          %1927 = sbr.rel (%p1925) target = $region76
        $region75: #{tpu_custom_call.1} parent=67 // pred_region
          %s1928 = sand.u32 %s225, 1
          %s1929 = scalar_lea.sflag [#allocation11], %s1928
          %s1930 = sand.u32 %s225, 1
          %s1931 = smul.addr %s1930, 8
          %s1932 = scalar_lea.vmem [#allocation10], %s1931
          %1933 = dma.done %s1929, 128
        $region76: #{tpu_custom_call.1} parent=67 // pred_fallthru
          _
      $region68: #{tpu_custom_call.1} parent=5 // pred_fallthru
        _
    $region6: #{tpu_custom_call.1} parent=1 // loop_footer
      %s29 = sadd.s32 1, %s25
    $region7: #{tpu_custom_call.1} parent=1 // loop_footer_branch
      %24 = sbr.rel target = $region3
    $region8: #{tpu_custom_call.1} parent=1 // loop_exit
      _
    %1934 = vsyncpa [#allocation5], 1
    %s1935 = scalar_lea.sflag [#allocation5], 1
    %1936 = vsyncpa %s1935, 1
    %1937 = vsyncpa [#allocation8], 1
    %s1938 = scalar_lea.sflag [#allocation8], 1
    %1939 = vsyncpa %s1938, 1
    %1940 = vsyncpa [#allocation6], 1
    %s1941 = scalar_lea.sflag [#allocation6], 1
    %1942 = vsyncpa %s1941, 1
    %1943 = vsyncpa [#allocation11], 1
    %s1944 = scalar_lea.sflag [#allocation11], 1
    %1945 = vsyncpa %s1944, 1

</llo_original>
